<compile_context>
chip_gen: v7x
topology: tpu7x:2x2x1
jax: 0.10.0
libtpu: 0.0.40
codegen_flags: <defaults>
</compile_context>

<pallas_src>
import math
import functools

import jax
import jax.numpy as jnp
from jax.experimental import pallas as pl
from jax.experimental.pallas import tpu as pltpu

NEG_INF = -1e30                     # finite mask value (no exp(-inf-+inf) NaNs)
VMEM_LIMIT = 48 * 1024 * 1024       # explicit scoped-VMEM limit (safe on v7x's 64 MiB)


def _pick_tile(dim, targets):
    """Largest target tile that divides `dim`; else use the full dim."""
    for t in targets:
        if t <= dim and dim % t == 0:
            return t
    return dim


def _row_tile(n):
    return _pick_tile(n, (256, 128, 64, 32, 16, 8))


def _col_tile(n):
    return _pick_tile(n, (512, 256, 128))


# ----------------------------- in-kernel math (f32) ---------------------------

def _layernorm(x, w, b, eps=1e-5):
    mu = jnp.mean(x, axis=-1, keepdims=True)
    var = jnp.mean(jnp.square(x - mu), axis=-1, keepdims=True)
    return (x - mu) * jax.lax.rsqrt(var + eps) * w + b


def _gelu_tanh(x):
    c = math.sqrt(2.0 / math.pi)
    return 0.5 * x * (1.0 + jnp.tanh(c * (x + 0.044715 * x * x * x)))


# ----------------------------- fused linear kernel ----------------------------
# out[i,j] = act( LN?(x[i,:]) @ W[:,j] + b[j] ) + residual[i,j]

def _fused_linear_kernel(has_ln, has_bias, act, has_residual, *refs):
    idx = 0
    x_ref = refs[idx]; idx += 1
    if has_ln:
        lnw_ref, lnb_ref = refs[idx], refs[idx + 1]; idx += 2
    w_ref = refs[idx]; idx += 1
    if has_bias:
        b_ref = refs[idx]; idx += 1
    if has_residual:
        res_ref = refs[idx]; idx += 1
    o_ref = refs[idx]

    x = x_ref[...].astype(jnp.float32)                     # (tm, K) f32
    if has_ln:
        x = _layernorm(x, lnw_ref[...].astype(jnp.float32),
                       lnb_ref[...].astype(jnp.float32))
    # bf16 MXU matmul, f32 accumulation.
    y = jnp.dot(x.astype(jnp.bfloat16), w_ref[...],
                preferred_element_type=jnp.float32)        # (tm, tn)
    if has_bias:
        y = y + b_ref[...].astype(jnp.float32)
    if act == "gelu":
        y = _gelu_tanh(y)
    if has_residual:
        y = y + res_ref[...].astype(jnp.float32)
    o_ref[...] = y.astype(o_ref.dtype)


def fused_linear(x, w, b=None, *, ln=None, act=None, residual=None):
    """x: (N, K) f32, w: (K, F) bf16, b: (1, F), ln: ((1,K),(1,K)) -> (N, F) f32."""
    N, K = x.shape
    F = w.shape[1]
    tm = _row_tile(N)
    tn = _col_tile(F)
    grid = (N // tm, F // tn)

    in_specs = [pl.BlockSpec((tm, K), lambda i, j: (i, 0))]
    args = [x]
    if ln is not None:
        in_specs += [pl.BlockSpec((1, K), lambda i, j: (0, 0)),
                     pl.BlockSpec((1, K), lambda i, j: (0, 0))]
        args += [ln[0], ln[1]]
    in_specs.append(pl.BlockSpec((K, tn), lambda i, j: (0, j)))
    args.append(w)
    if b is not None:
        in_specs.append(pl.BlockSpec((1, tn), lambda i, j: (0, j)))
        args.append(b)
    if residual is not None:
        in_specs.append(pl.BlockSpec((tm, tn), lambda i, j: (i, j)))
        args.append(residual)

    kernel = functools.partial(_fused_linear_kernel,
                               ln is not None, b is not None, act,
                               residual is not None)
    return pl.pallas_call(
        kernel,
        out_shape=jax.ShapeDtypeStruct((N, F), jnp.float32),
        grid=grid,
        in_specs=in_specs,
        out_specs=pl.BlockSpec((tm, tn), lambda i, j: (i, j)),
        compiler_params=pltpu.CompilerParams(
            dimension_semantics=("parallel", "parallel"),
            vmem_limit_bytes=VMEM_LIMIT),
    )(*args)


# ----------------------------- flash attention --------------------------------
# q, k, v: (B, H, T, hd) bf16 -> out (B, H, T, hd) f32. Heads batched per step.

def _flash_attn_kernel(scale, tq, tk,
                       q_ref, k_ref, v_ref, o_ref, m_sc, l_sc, acc_sc):
    qi = pl.program_id(1)
    ki = pl.program_id(2)
    q_start = qi * tq
    k_start = ki * tk

    @pl.when(ki == 0)
    def _():
        m_sc[...] = jnp.full_like(m_sc, NEG_INF)
        l_sc[...] = jnp.zeros_like(l_sc)
        acc_sc[...] = jnp.zeros_like(acc_sc)

    # Skip KV tiles strictly above the causal diagonal.
    @pl.when(k_start <= q_start + tq - 1)
    def _():
        q = q_ref[0]                                        # (H, tq, hd) bf16
        k = k_ref[0]
        v = v_ref[0]
        s = jnp.einsum('hqd,hkd->hqk', q, k,
                       preferred_element_type=jnp.float32) * scale
        row = q_start + jax.lax.broadcasted_iota(jnp.int32, (tq, tk), 0)
        col = k_start + jax.lax.broadcasted_iota(jnp.int32, (tq, tk), 1)
        s = jnp.where((row >= col)[None, :, :], s, NEG_INF)

        m_prev = m_sc[...]                                  # (H, tq, 1)
        m_new = jnp.maximum(m_prev, s.max(axis=-1, keepdims=True))
        alpha = jnp.exp(m_prev - m_new)
        p = jnp.exp(s - m_new)                              # (H, tq, tk) f32
        l_sc[...] = alpha * l_sc[...] + p.sum(axis=-1, keepdims=True)
        acc_sc[...] = alpha * acc_sc[...] + jnp.einsum(
            'hqk,hkd->hqd', p.astype(v.dtype), v,
            preferred_element_type=jnp.float32)
        m_sc[...] = m_new

    @pl.when(ki == pl.num_programs(2) - 1)
    def _():
        o_ref[0] = (acc_sc[...] *
                    pl.reciprocal(l_sc[...], approx=True)).astype(o_ref.dtype)


def flash_attention(q, k, v):
    B, H, T, D = q.shape
    scale = 1.0 / math.sqrt(D)
    t = _row_tile(T)
    grid = (B, T // t, T // t)
    return pl.pallas_call(
        functools.partial(_flash_attn_kernel, scale, t, t),
        out_shape=jax.ShapeDtypeStruct((B, H, T, D), jnp.float32),
        grid=grid,
        in_specs=[pl.BlockSpec((1, H, t, D), lambda b, qi, ki: (b, 0, qi, 0)),
                  pl.BlockSpec((1, H, t, D), lambda b, qi, ki: (b, 0, ki, 0)),
                  pl.BlockSpec((1, H, t, D), lambda b, qi, ki: (b, 0, ki, 0))],
        out_specs=pl.BlockSpec((1, H, t, D), lambda b, qi, ki: (b, 0, qi, 0)),
        scratch_shapes=[pltpu.VMEM((H, t, 1), jnp.float32),
                        pltpu.VMEM((H, t, 1), jnp.float32),
                        pltpu.VMEM((H, t, D), jnp.float32)],
        compiler_params=pltpu.CompilerParams(
            dimension_semantics=("parallel", "parallel", "arbitrary"),
            vmem_limit_bytes=VMEM_LIMIT),
    )(q, k, v)


# ----------------------------- transformer block -------------------------------

def transformer_block(x, p, n_head):
    B, T, C = x.shape
    N = B * T
    hd = C // n_head
    xf = x.reshape(N, C)

    # LN1 + QKV projection (fused).
    qkv = fused_linear(xf, p["wqkv"], p["bqkv"], ln=(p["ln1w"], p["ln1b"]))
    # Split heads (XLA glue), bf16 for the attention MXU/DMA.
    qkv = qkv.reshape(B, T, 3, n_head, hd).transpose(2, 0, 3, 1, 4)
    qkv = qkv.astype(jnp.bfloat16)
    q, k, v = qkv[0], qkv[1], qkv[2]                        # (B, H, T, hd)

    y = flash_attention(q, k, v)                            # (B, H, T, hd) f32
    y = y.transpose(0, 2, 1, 3).reshape(N, C)

    # Output projection + residual (fused).
    x1 = fused_linear(y, p["wpr"], p["bpr"], residual=xf)
    # LN2 + MLP fc + GELU (fused).
    h = fused_linear(x1, p["wfc"], p["bfc"], ln=(p["ln2w"], p["ln2b"]),
                     act="gelu")
    # MLP proj + residual (fused).
    x2 = fused_linear(h, p["wpr2"], p["bpr2"], residual=x1)
    return x2.reshape(B, T, C)


# ----------------------------- parameter init ----------------------------------

def init_params(key, *, vocab_size, block_size, n_layer, n_head, n_embd):
    # TODO(synk): for a real GPT-2 vocab (50257) pad V to a multiple of 128
    # before building wte_t so the lm_head tiles stay lane-aligned.
    C = n_embd
    std = 0.02
    proj_std = 0.02 * (2 * n_layer) ** -0.5

    keys = jax.random.split(key, 2 + 4 * n_layer)
    wte = std * jax.random.normal(keys[0], (vocab_size, C), jnp.float32)
    wpe = std * jax.random.normal(keys[1], (block_size, C), jnp.float32)

    layers = []
    for li in range(n_layer):
        k0, k1, k2, k3 = keys[2 + 4 * li: 6 + 4 * li]
        layers.append(dict(
            ln1w=jnp.ones((1, C), jnp.float32),
            ln1b=jnp.zeros((1, C), jnp.float32),
            wqkv=(std * jax.random.normal(k0, (C, 3 * C))).astype(jnp.bfloat16),
            bqkv=jnp.zeros((1, 3 * C), jnp.float32),
            wpr=(proj_std * jax.random.normal(k1, (C, C))).astype(jnp.bfloat16),
            bpr=jnp.zeros((1, C), jnp.float32),
            ln2w=jnp.ones((1, C), jnp.float32),
            ln2b=jnp.zeros((1, C), jnp.float32),
            wfc=(std * jax.random.normal(k2, (C, 4 * C))).astype(jnp.bfloat16),
            bfc=jnp.zeros((1, 4 * C), jnp.float32),
            wpr2=(proj_std * jax.random.normal(k3, (4 * C, C))).astype(jnp.bfloat16),
            bpr2=jnp.zeros((1, C), jnp.float32),
        ))

    return dict(
        wte=wte,                                   # (V, C) f32 for the gather
        wte_t=wte.T.astype(jnp.bfloat16),          # (C, V) bf16, tied lm_head
        wpe=wpe,
        layers=layers,
        lnfw=jnp.ones((1, C), jnp.float32),
        lnfb=jnp.zeros((1, C), jnp.float32),
    )


# ----------------------------- full forward ------------------------------------

def gpt_forward(params, idx, n_head):
    B, T = idx.shape
    C = params["wte"].shape[1]
    # Embedding lookup is a gather — kept in plain JAX glue.
    tok_emb = jnp.take(params["wte"], idx, axis=0)          # (B, T, C)
    pos_emb = params["wpe"][:T][None, :, :]                 # (1, T, C)
    x = tok_emb + pos_emb

    for lp in params["layers"]:
        x = transformer_block(x, lp, n_head)

    # Final LN + lm_head, tiled over (rows, vocab) with lane-dense V.
    logits = fused_linear(x.reshape(B * T, C), params["wte_t"],
                          ln=(params["lnfw"], params["lnfb"]))
    return logits.reshape(B, T, -1)


# ----------------------------- main ---------------------------------------------

if __name__ == "__main__":
    # Small GPTConfig-consistent shapes.
    B, T = 2, 8
    vocab_size, block_size = 128, 8
    n_layer, n_head, n_embd = 2, 2, 32

    key = jax.random.PRNGKey(0)
    kp, ki = jax.random.split(key)
    params = init_params(kp, vocab_size=vocab_size, block_size=block_size,
                         n_layer=n_layer, n_head=n_head, n_embd=n_embd)
    idx = jax.random.randint(ki, (B, T), 0, vocab_size, dtype=jnp.int32)

    fwd = jax.jit(gpt_forward, static_argnames=("n_head",))
    # TODO(synk): cross-entropy loss (targets branch) not implemented; forward
    # matches GPT.forward(idx, targets=None) which returns (logits, None).
    logits = fwd(params, idx, n_head=n_head)
    jax.block_until_ready(logits)
    assert logits.shape == (B, T, vocab_size)
    print("KERNEL_OK")
</pallas_src>

<mosaic_0001>
module attributes {stable_mosaic.version = 11 : i64} {
  func.func @_fused_linear_kernel(%arg0: i32, %arg1: i32, %arg2: memref<16x32xf32, #tpu.memory_space<vmem>>, %arg3: memref<1x32xf32, #tpu.memory_space<vmem>>, %arg4: memref<1x32xf32, #tpu.memory_space<vmem>>, %arg5: memref<32x96xbf16, #tpu.memory_space<vmem>>, %arg6: memref<1x96xf32, #tpu.memory_space<vmem>>, %arg7: memref<16x96xf32, #tpu.memory_space<vmem>>) attributes {dimension_semantics = [#tpu.dimension_semantics<parallel>, #tpu.dimension_semantics<parallel>], iteration_bounds = array<i64: 1, 1>, scalar_prefetch = 0 : i64, scratch_operands = 0 : i64, tpu.core_type = #tpu.core_type<tc>, window_params = [{transform_indices = @transform_0, window_bounds = array<i64: 16, 32>}, {pipeline_mode = #tpu.pipeline_mode<synchronous>, transform_indices = @transform_1, window_bounds = array<i64: 1, 32>}, {pipeline_mode = #tpu.pipeline_mode<synchronous>, transform_indices = @transform_2, window_bounds = array<i64: 1, 32>}, {transform_indices = @transform_3, window_bounds = array<i64: 32, 96>}, {transform_indices = @transform_4, window_bounds = array<i64: 1, 96>}, {transform_indices = @transform_5, window_bounds = array<i64: 16, 96>}]} {
    %c0 = arith.constant 0 : index
    %c0_0 = arith.constant 0 : index
    %0 = vector.load %arg2[%c0, %c0_0] : memref<16x32xf32, #tpu.memory_space<vmem>>, vector<16x32xf32>
    %c0_1 = arith.constant 0 : index
    %c0_2 = arith.constant 0 : index
    %1 = vector.load %arg3[%c0_1, %c0_2] : memref<1x32xf32, #tpu.memory_space<vmem>>, vector<1x32xf32>
    %c0_3 = arith.constant 0 : index
    %c0_4 = arith.constant 0 : index
    %2 = vector.load %arg4[%c0_3, %c0_4] : memref<1x32xf32, #tpu.memory_space<vmem>>, vector<1x32xf32>
    %cst = arith.constant dense<0.000000e+00> : vector<16xf32>
    %3 = vector.multi_reduction <add>, %0, %cst [1] : vector<16x32xf32> to vector<16xf32>
    %4 = vector.shape_cast %3 : vector<16xf32> to vector<16x1xf32>
    %cst_5 = arith.constant 3.200000e+01 : f32
    %5 = vector.broadcast %cst_5 : f32 to vector<16x1xf32>
    %6 = arith.divf %4, %5 : vector<16x1xf32>
    %7 = vector.broadcast %6 : vector<16x1xf32> to vector<16x32xf32>
    %8 = arith.subf %0, %7 : vector<16x32xf32>
    %9 = arith.mulf %8, %8 : vector<16x32xf32>
    %cst_6 = arith.constant dense<0.000000e+00> : vector<16xf32>
    %10 = vector.multi_reduction <add>, %9, %cst_6 [1] : vector<16x32xf32> to vector<16xf32>
    %11 = vector.shape_cast %10 : vector<16xf32> to vector<16x1xf32>
    %cst_7 = arith.constant 3.200000e+01 : f32
    %12 = vector.broadcast %cst_7 : f32 to vector<16x1xf32>
    %13 = arith.divf %11, %12 : vector<16x1xf32>
    %14 = vector.broadcast %6 : vector<16x1xf32> to vector<16x32xf32>
    %15 = arith.subf %0, %14 : vector<16x32xf32>
    %cst_8 = arith.constant 9.99999974E-6 : f32
    %16 = vector.broadcast %cst_8 : f32 to vector<16x1xf32>
    %17 = arith.addf %13, %16 : vector<16x1xf32>
    %18 = math.rsqrt %17 : vector<16x1xf32>
    %19 = vector.broadcast %18 : vector<16x1xf32> to vector<16x32xf32>
    %20 = arith.mulf %15, %19 : vector<16x32xf32>
    %21 = vector.broadcast %1 : vector<1x32xf32> to vector<16x32xf32>
    %22 = arith.mulf %20, %21 : vector<16x32xf32>
    %23 = vector.broadcast %2 : vector<1x32xf32> to vector<16x32xf32>
    %24 = arith.addf %22, %23 : vector<16x32xf32>
    %25 = arith.truncf %24 : vector<16x32xf32> to vector<16x32xbf16>
    %c0_9 = arith.constant 0 : index
    %c0_10 = arith.constant 0 : index
    %26 = vector.load %arg5[%c0_9, %c0_10] : memref<32x96xbf16, #tpu.memory_space<vmem>>, vector<32x96xbf16>
    %cst_11 = arith.constant dense<0.000000e+00> : vector<16x96xf32>
    %27 = tpu.matmul %25, %26, %cst_11 {dimension_numbers = #tpu.dot_dimension_numbers<[1], [0], [0], [1], [0, 0, 1, 1], [], []>} : vector<16x32xbf16>, vector<32x96xbf16>, vector<16x96xf32> -> vector<16x96xf32>
    %c0_12 = arith.constant 0 : index
    %c0_13 = arith.constant 0 : index
    %28 = vector.load %arg6[%c0_12, %c0_13] : memref<1x96xf32, #tpu.memory_space<vmem>>, vector<1x96xf32>
    %29 = vector.broadcast %28 : vector<1x96xf32> to vector<16x96xf32>
    %30 = arith.addf %27, %29 : vector<16x96xf32>
    %c0_14 = arith.constant 0 : index
    %c0_15 = arith.constant 0 : index
    %31 = vector.load %arg7[%c0_14, %c0_15] : memref<16x96xf32, #tpu.memory_space<vmem>>, vector<16x96xf32>
    tpu.vector_store %arg7[%c0_14, %c0_15], %30 {strides = array<i32>} : memref<16x96xf32, #tpu.memory_space<vmem>>, vector<16x96xf32>,
    return
  }
  func.func @transform_0(%arg0: i32, %arg1: i32) -> (i32, i32) {
    %c0_i32 = arith.constant 0 : i32
    %c0_i32_0 = arith.constant 0 : i32
    return %arg0, %c0_i32 : i32, i32
  }
  func.func @transform_1(%arg0: i32, %arg1: i32) -> (i32, i32) {
    %c0_i32 = arith.constant 0 : i32
    %c0_i32_0 = arith.constant 0 : i32
    %c0_i32_1 = arith.constant 0 : i32
    return %c0_i32, %c0_i32_0 : i32, i32
  }
  func.func @transform_2(%arg0: i32, %arg1: i32) -> (i32, i32) {
    %c0_i32 = arith.constant 0 : i32
    %c0_i32_0 = arith.constant 0 : i32
    %c0_i32_1 = arith.constant 0 : i32
    return %c0_i32, %c0_i32_0 : i32, i32
  }
  func.func @transform_3(%arg0: i32, %arg1: i32) -> (i32, i32) {
    %c0_i32 = arith.constant 0 : i32
    %c0_i32_0 = arith.constant 0 : i32
    return %c0_i32, %arg1 : i32, i32
  }
  func.func @transform_4(%arg0: i32, %arg1: i32) -> (i32, i32) {
    %c0_i32 = arith.constant 0 : i32
    %c0_i32_0 = arith.constant 0 : i32
    return %c0_i32, %arg1 : i32, i32
  }
  func.func @transform_5(%arg0: i32, %arg1: i32) -> (i32, i32) {
    %c0_i32 = arith.constant 0 : i32
    return %arg0, %arg1 : i32, i32
  }
}

module attributes {stable_mosaic.version = 11 : i64} {
  func.func @_flash_attn_kernel(%arg0: i32, %arg1: i32, %arg2: i32, %arg3: memref<1x2x8x16xbf16, #tpu.memory_space<vmem>>, %arg4: memref<1x2x8x16xbf16, #tpu.memory_space<vmem>>, %arg5: memref<1x2x8x16xbf16, #tpu.memory_space<vmem>>, %arg6: memref<1x2x8x16xf32, #tpu.memory_space<vmem>>, %arg7: memref<2x8x1xf32, #tpu.memory_space<vmem>>, %arg8: memref<2x8x1xf32, #tpu.memory_space<vmem>>, %arg9: memref<2x8x16xf32, #tpu.memory_space<vmem>>) attributes {dimension_semantics = [#tpu.dimension_semantics<parallel>, #tpu.dimension_semantics<parallel>, #tpu.dimension_semantics<arbitrary>], iteration_bounds = array<i64: 2, 1, 1>, scalar_prefetch = 0 : i64, scratch_operands = 3 : i64, tpu.core_type = #tpu.core_type<tc>, window_params = [{transform_indices = @transform_0, window_bounds = array<i64: 1, 2, 8, 16>}, {transform_indices = @transform_1, window_bounds = array<i64: 1, 2, 8, 16>}, {transform_indices = @transform_2, window_bounds = array<i64: 1, 2, 8, 16>}, {transform_indices = @transform_3, window_bounds = array<i64: 1, 2, 8, 16>}]} {
    %c8_i32 = arith.constant 8 : i32
    %0 = arith.muli %arg1, %c8_i32 : i32
    %c8_i32_0 = arith.constant 8 : i32
    %1 = arith.muli %arg2, %c8_i32_0 : i32
    %c0_i32 = arith.constant 0 : i32
    %2 = arith.cmpi eq, %arg2, %c0_i32 : i32
    %3 = arith.extui %2 : i1 to i32
    %c0_i32_1 = arith.constant 0 : i32
    %4 = arith.cmpi ne, %3, %c0_i32_1 : i32
    scf.if %4 {
      %cst = arith.constant -1.000000e+30 : f32
      %13 = vector.broadcast %cst : f32 to vector<2x8x1xf32>
      %c0 = arith.constant 0 : index
      %c0_6 = arith.constant 0 : index
      %c0_7 = arith.constant 0 : index
      %14 = vector.load %arg7[%c0, %c0_6, %c0_7] : memref<2x8x1xf32, #tpu.memory_space<vmem>>, vector<2x8x1xf32>
      tpu.vector_store %arg7[%c0, %c0_6, %c0_7], %13 {strides = array<i32>} : memref<2x8x1xf32, #tpu.memory_space<vmem>>, vector<2x8x1xf32>,
      %cst_8 = arith.constant 0.000000e+00 : f32
      %15 = vector.broadcast %cst_8 : f32 to vector<2x8x1xf32>
      %c0_9 = arith.constant 0 : index
      %c0_10 = arith.constant 0 : index
      %c0_11 = arith.constant 0 : index
      %16 = vector.load %arg8[%c0_9, %c0_10, %c0_11] : memref<2x8x1xf32, #tpu.memory_space<vmem>>, vector<2x8x1xf32>
      tpu.vector_store %arg8[%c0_9, %c0_10, %c0_11], %15 {strides = array<i32>} : memref<2x8x1xf32, #tpu.memory_space<vmem>>, vector<2x8x1xf32>,
      %cst_12 = arith.constant 0.000000e+00 : f32
      %17 = vector.broadcast %cst_12 : f32 to vector<2x8x16xf32>
      %c0_13 = arith.constant 0 : index
      %c0_14 = arith.constant 0 : index
      %c0_15 = arith.constant 0 : index
      %18 = vector.load %arg9[%c0_13, %c0_14, %c0_15] : memref<2x8x16xf32, #tpu.memory_space<vmem>>, vector<2x8x16xf32>
      tpu.vector_store %arg9[%c0_13, %c0_14, %c0_15], %17 {strides = array<i32>} : memref<2x8x16xf32, #tpu.memory_space<vmem>>, vector<2x8x16xf32>,
    } else {
    }
    %c8_i32_2 = arith.constant 8 : i32
    %5 = arith.addi %0, %c8_i32_2 : i32
    %c1_i32 = arith.constant 1 : i32
    %6 = arith.subi %5, %c1_i32 : i32
    %7 = arith.cmpi sle, %1, %6 : i32
    %8 = arith.extui %7 : i1 to i32
    %c0_i32_3 = arith.constant 0 : i32
    %9 = arith.cmpi ne, %8, %c0_i32_3 : i32
    scf.if %9 {
      %c0 = arith.constant 0 : index
      %c0_6 = arith.constant 0 : index
      %c0_7 = arith.constant 0 : index
      %c0_8 = arith.constant 0 : index
      %13 = vector.load %arg3[%c0, %c0_6, %c0_7, %c0_8] : memref<1x2x8x16xbf16, #tpu.memory_space<vmem>>, vector<1x2x8x16xbf16>
      %14 = vector.shape_cast %13 : vector<1x2x8x16xbf16> to vector<2x8x16xbf16>
      %c0_9 = arith.constant 0 : index
      %c0_10 = arith.constant 0 : index
      %c0_11 = arith.constant 0 : index
      %c0_12 = arith.constant 0 : index
      %15 = vector.load %arg4[%c0_9, %c0_10, %c0_11, %c0_12] : memref<1x2x8x16xbf16, #tpu.memory_space<vmem>>, vector<1x2x8x16xbf16>
      %16 = vector.shape_cast %15 : vector<1x2x8x16xbf16> to vector<2x8x16xbf16>
      %c0_13 = arith.constant 0 : index
      %c0_14 = arith.constant 0 : index
      %c0_15 = arith.constant 0 : index
      %c0_16 = arith.constant 0 : index
      %17 = vector.load %arg5[%c0_13, %c0_14, %c0_15, %c0_16] : memref<1x2x8x16xbf16, #tpu.memory_space<vmem>>, vector<1x2x8x16xbf16>
      %18 = vector.shape_cast %17 : vector<1x2x8x16xbf16> to vector<2x8x16xbf16>
      "tpu.trace_start"() <{level = 10 : i32, message = "hqd,hkd->hqk"}> : () -> ()
      %cst = arith.constant dense<0.000000e+00> : vector<2x8x8xf32>
      %19 = tpu.matmul %14, %16, %cst {dimension_numbers = #tpu.dot_dimension_numbers<[2], [2], [1], [1], [0, 0, 0, 1, 1, 1], [0], [0]>} : vector<2x8x16xbf16>, vector<2x8x16xbf16>, vector<2x8x8xf32> -> vector<2x8x8xf32>
      "tpu.trace_stop"() : () -> ()
      %cst_17 = arith.constant 2.500000e-01 : f32
      %20 = vector.broadcast %cst_17 : f32 to vector<2x8x8xf32>
      %21 = arith.mulf %19, %20 : vector<2x8x8xf32>
      %22 = tpu.iota {dimensions = array<i32: 0>} : vector<8x8xi32>
      %23 = vector.broadcast %0 : i32 to vector<8x8xi32>
      %24 = arith.addi %23, %22 : vector<8x8xi32>
      %25 = tpu.iota {dimensions = array<i32: 1>} : vector<8x8xi32>
      %26 = vector.broadcast %1 : i32 to vector<8x8xi32>
      %27 = arith.addi %26, %25 : vector<8x8xi32>
      %28 = arith.cmpi sge, %24, %27 : vector<8x8xi32>
      %29 = vector.shape_cast %28 : vector<8x8xi1> to vector<1x8x8xi1>
      %cst_18 = arith.constant -1.000000e+30 : f32
      %30 = vector.shape_cast %29 : vector<1x8x8xi1> to vector<1x8x8xi1>
      %31 = vector.broadcast %30 : vector<1x8x8xi1> to vector<2x8x8xi1>
      %32 = vector.broadcast %cst_18 : f32 to vector<2x8x8xf32>
      %33 = arith.select %31, %21, %32 : vector<2x8x8xi1>, vector<2x8x8xf32>
      %c0_19 = arith.constant 0 : index
      %c0_20 = arith.constant 0 : index
      %c0_21 = arith.constant 0 : index
      %34 = vector.load %arg7[%c0_19, %c0_20, %c0_21] : memref<2x8x1xf32, #tpu.memory_space<vmem>>, vector<2x8x1xf32>
      %cst_22 = arith.constant dense<0xFF800000> : vector<2x8xf32>
      %35 = vector.multi_reduction <maximumf>, %33, %cst_22 [2] : vector<2x8x8xf32> to vector<2x8xf32>
      %36 = vector.shape_cast %35 : vector<2x8xf32> to vector<2x8x1xf32>
      %37 = arith.maximumf %34, %36 : vector<2x8x1xf32>
      %38 = arith.subf %34, %37 : vector<2x8x1xf32>
      %39 = math.exp %38 : vector<2x8x1xf32>
      %40 = vector.broadcast %37 : vector<2x8x1xf32> to vector<2x8x8xf32>
      %41 = arith.subf %33, %40 : vector<2x8x8xf32>
      %42 = math.exp %41 : vector<2x8x8xf32>
      %c0_23 = arith.constant 0 : index
      %c0_24 = arith.constant 0 : index
      %c0_25 = arith.constant 0 : index
      %43 = vector.load %arg8[%c0_23, %c0_24, %c0_25] : memref<2x8x1xf32, #tpu.memory_space<vmem>>, vector<2x8x1xf32>
      %44 = arith.mulf %39, %43 : vector<2x8x1xf32>
      %cst_26 = arith.constant dense<0.000000e+00> : vector<2x8xf32>
      %45 = vector.multi_reduction <add>, %42, %cst_26 [2] : vector<2x8x8xf32> to vector<2x8xf32>
      %46 = vector.shape_cast %45 : vector<2x8xf32> to vector<2x8x1xf32>
      %47 = arith.addf %44, %46 : vector<2x8x1xf32>
      %c0_27 = arith.constant 0 : index
      %c0_28 = arith.constant 0 : index
      %c0_29 = arith.constant 0 : index
      %48 = vector.load %arg8[%c0_27, %c0_28, %c0_29] : memref<2x8x1xf32, #tpu.memory_space<vmem>>, vector<2x8x1xf32>
      tpu.vector_store %arg8[%c0_27, %c0_28, %c0_29], %47 {strides = array<i32>} : memref<2x8x1xf32, #tpu.memory_space<vmem>>, vector<2x8x1xf32>,
      %c0_30 = arith.constant 0 : index
      %c0_31 = arith.constant 0 : index
      %c0_32 = arith.constant 0 : index
      %49 = vector.load %arg9[%c0_30, %c0_31, %c0_32] : memref<2x8x16xf32, #tpu.memory_space<vmem>>, vector<2x8x16xf32>
      %50 = vector.broadcast %39 : vector<2x8x1xf32> to vector<2x8x16xf32>
      %51 = arith.mulf %50, %49 : vector<2x8x16xf32>
      %52 = arith.truncf %42 : vector<2x8x8xf32> to vector<2x8x8xbf16>
      "tpu.trace_start"() <{level = 10 : i32, message = "hqk,hkd->hqd"}> : () -> ()
      %cst_33 = arith.constant dense<0.000000e+00> : vector<2x8x16xf32>
      %53 = tpu.matmul %52, %18, %cst_33 {dimension_numbers = #tpu.dot_dimension_numbers<[2], [1], [1], [2], [0, 0, 0, 1, 1, 2], [0], [0]>} : vector<2x8x8xbf16>, vector<2x8x16xbf16>, vector<2x8x16xf32> -> vector<2x8x16xf32>
      "tpu.trace_stop"() : () -> ()
      %54 = arith.addf %51, %53 : vector<2x8x16xf32>
      %c0_34 = arith.constant 0 : index
      %c0_35 = arith.constant 0 : index
      %c0_36 = arith.constant 0 : index
      %55 = vector.load %arg9[%c0_34, %c0_35, %c0_36] : memref<2x8x16xf32, #tpu.memory_space<vmem>>, vector<2x8x16xf32>
      tpu.vector_store %arg9[%c0_34, %c0_35, %c0_36], %54 {strides = array<i32>} : memref<2x8x16xf32, #tpu.memory_space<vmem>>, vector<2x8x16xf32>,
      %c0_37 = arith.constant 0 : index
      %c0_38 = arith.constant 0 : index
      %c0_39 = arith.constant 0 : index
      %56 = vector.load %arg7[%c0_37, %c0_38, %c0_39] : memref<2x8x1xf32, #tpu.memory_space<vmem>>, vector<2x8x1xf32>
      tpu.vector_store %arg7[%c0_37, %c0_38, %c0_39], %37 {strides = array<i32>} : memref<2x8x1xf32, #tpu.memory_space<vmem>>, vector<2x8x1xf32>,
    } else {
    }
    %c0_i32_4 = arith.constant 0 : i32
    %10 = arith.cmpi eq, %arg2, %c0_i32_4 : i32
    %11 = arith.extui %10 : i1 to i32
    %c0_i32_5 = arith.constant 0 : i32
    %12 = arith.cmpi ne, %11, %c0_i32_5 : i32
    scf.if %12 {
      %c0 = arith.constant 0 : index
      %c0_6 = arith.constant 0 : index
      %c0_7 = arith.constant 0 : index
      %13 = vector.load %arg9[%c0, %c0_6, %c0_7] : memref<2x8x16xf32, #tpu.memory_space<vmem>>, vector<2x8x16xf32>
      %c0_8 = arith.constant 0 : index
      %c0_9 = arith.constant 0 : index
      %c0_10 = arith.constant 0 : index
      %14 = vector.load %arg8[%c0_8, %c0_9, %c0_10] : memref<2x8x1xf32, #tpu.memory_space<vmem>>, vector<2x8x1xf32>
      %15 = tpu.reciprocal %14 {approx = true} : vector<2x8x1xf32> -> vector<2x8x1xf32>
      %16 = vector.broadcast %15 : vector<2x8x1xf32> to vector<2x8x16xf32>
      %17 = arith.mulf %13, %16 : vector<2x8x16xf32>
      %c0_11 = arith.constant 0 : index
      %c0_12 = arith.constant 0 : index
      %c0_13 = arith.constant 0 : index
      %c0_14 = arith.constant 0 : index
      %18 = vector.load %arg6[%c0_11, %c0_12, %c0_13, %c0_14] : memref<1x2x8x16xf32, #tpu.memory_space<vmem>>, vector<1x2x8x16xf32>
      %19 = vector.shape_cast %18 : vector<1x2x8x16xf32> to vector<2x8x16xf32>
      %20 = vector.shape_cast %17 : vector<2x8x16xf32> to vector<1x2x8x16xf32>
      tpu.vector_store %arg6[%c0_11, %c0_12, %c0_13, %c0_14], %20 {strides = array<i32>} : memref<1x2x8x16xf32, #tpu.memory_space<vmem>>, vector<1x2x8x16xf32>,
    } else {
    }
    return
  }
  func.func @transform_0(%arg0: i32, %arg1: i32, %arg2: i32) -> (i32, i32, i32, i32) {
    %c0_i32 = arith.constant 0 : i32
    %c0_i32_0 = arith.constant 0 : i32
    %c0_i32_1 = arith.constant 0 : i32
    return %arg0, %c0_i32, %arg1, %c0_i32_0 : i32, i32, i32, i32
  }
  func.func @transform_1(%arg0: i32, %arg1: i32, %arg2: i32) -> (i32, i32, i32, i32) {
    %c0_i32 = arith.constant 0 : i32
    %c0_i32_0 = arith.constant 0 : i32
    %c0_i32_1 = arith.constant 0 : i32
    return %arg0, %c0_i32, %arg2, %c0_i32_0 : i32, i32, i32, i32
  }
  func.func @transform_2(%arg0: i32, %arg1: i32, %arg2: i32) -> (i32, i32, i32, i32) {
    %c0_i32 = arith.constant 0 : i32
    %c0_i32_0 = arith.constant 0 : i32
    %c0_i32_1 = arith.constant 0 : i32
    return %arg0, %c0_i32, %arg2, %c0_i32_0 : i32, i32, i32, i32
  }
  func.func @transform_3(%arg0: i32, %arg1: i32, %arg2: i32) -> (i32, i32, i32, i32) {
    %c0_i32 = arith.constant 0 : i32
    %c0_i32_0 = arith.constant 0 : i32
    %c0_i32_1 = arith.constant 0 : i32
    return %arg0, %c0_i32, %arg1, %c0_i32_0 : i32, i32, i32, i32
  }
}

module attributes {stable_mosaic.version = 11 : i64} {
  func.func @_fused_linear_kernel(%arg0: i32, %arg1: i32, %arg2: memref<16x32xf32, #tpu.memory_space<vmem>>, %arg3: memref<32x32xbf16, #tpu.memory_space<vmem>>, %arg4: memref<1x32xf32, #tpu.memory_space<vmem>>, %arg5: memref<16x32xf32, #tpu.memory_space<vmem>>, %arg6: memref<16x32xf32, #tpu.memory_space<vmem>>) attributes {dimension_semantics = [#tpu.dimension_semantics<parallel>, #tpu.dimension_semantics<parallel>], iteration_bounds = array<i64: 1, 1>, scalar_prefetch = 0 : i64, scratch_operands = 0 : i64, tpu.core_type = #tpu.core_type<tc>, window_params = [{transform_indices = @transform_0, window_bounds = array<i64: 16, 32>}, {transform_indices = @transform_1, window_bounds = array<i64: 32, 32>}, {transform_indices = @transform_2, window_bounds = array<i64: 1, 32>}, {transform_indices = @transform_3, window_bounds = array<i64: 16, 32>}, {transform_indices = @transform_4, window_bounds = array<i64: 16, 32>}]} {
    %c0 = arith.constant 0 : index
    %c0_0 = arith.constant 0 : index
    %0 = vector.load %arg2[%c0, %c0_0] : memref<16x32xf32, #tpu.memory_space<vmem>>, vector<16x32xf32>
    %1 = arith.truncf %0 : vector<16x32xf32> to vector<16x32xbf16>
    %c0_1 = arith.constant 0 : index
    %c0_2 = arith.constant 0 : index
    %2 = vector.load %arg3[%c0_1, %c0_2] : memref<32x32xbf16, #tpu.memory_space<vmem>>, vector<32x32xbf16>
    %cst = arith.constant dense<0.000000e+00> : vector<16x32xf32>
    %3 = tpu.matmul %1, %2, %cst {dimension_numbers = #tpu.dot_dimension_numbers<[1], [0], [0], [1], [0, 0, 1, 1], [], []>} : vector<16x32xbf16>, vector<32x32xbf16>, vector<16x32xf32> -> vector<16x32xf32>
    %c0_3 = arith.constant 0 : index
    %c0_4 = arith.constant 0 : index
    %4 = vector.load %arg4[%c0_3, %c0_4] : memref<1x32xf32, #tpu.memory_space<vmem>>, vector<1x32xf32>
    %5 = vector.broadcast %4 : vector<1x32xf32> to vector<16x32xf32>
    %6 = arith.addf %3, %5 : vector<16x32xf32>
    %c0_5 = arith.constant 0 : index
    %c0_6 = arith.constant 0 : index
    %7 = vector.load %arg5[%c0_5, %c0_6] : memref<16x32xf32, #tpu.memory_space<vmem>>, vector<16x32xf32>
    %8 = arith.addf %6, %7 : vector<16x32xf32>
    %c0_7 = arith.constant 0 : index
    %c0_8 = arith.constant 0 : index
    %9 = vector.load %arg6[%c0_7, %c0_8] : memref<16x32xf32, #tpu.memory_space<vmem>>, vector<16x32xf32>
    tpu.vector_store %arg6[%c0_7, %c0_8], %8 {strides = array<i32>} : memref<16x32xf32, #tpu.memory_space<vmem>>, vector<16x32xf32>,
    return
  }
  func.func @transform_0(%arg0: i32, %arg1: i32) -> (i32, i32) {
    %c0_i32 = arith.constant 0 : i32
    %c0_i32_0 = arith.constant 0 : i32
    return %arg0, %c0_i32 : i32, i32
  }
  func.func @transform_1(%arg0: i32, %arg1: i32) -> (i32, i32) {
    %c0_i32 = arith.constant 0 : i32
    %c0_i32_0 = arith.constant 0 : i32
    return %c0_i32, %arg1 : i32, i32
  }
  func.func @transform_2(%arg0: i32, %arg1: i32) -> (i32, i32) {
    %c0_i32 = arith.constant 0 : i32
    %c0_i32_0 = arith.constant 0 : i32
    return %c0_i32, %arg1 : i32, i32
  }
  func.func @transform_3(%arg0: i32, %arg1: i32) -> (i32, i32) {
    %c0_i32 = arith.constant 0 : i32
    return %arg0, %arg1 : i32, i32
  }
  func.func @transform_4(%arg0: i32, %arg1: i32) -> (i32, i32) {
    %c0_i32 = arith.constant 0 : i32
    return %arg0, %arg1 : i32, i32
  }
}

module attributes {stable_mosaic.version = 11 : i64} {
  func.func @_fused_linear_kernel(%arg0: i32, %arg1: i32, %arg2: memref<16x32xf32, #tpu.memory_space<vmem>>, %arg3: memref<1x32xf32, #tpu.memory_space<vmem>>, %arg4: memref<1x32xf32, #tpu.memory_space<vmem>>, %arg5: memref<32x128xbf16, #tpu.memory_space<vmem>>, %arg6: memref<1x128xf32, #tpu.memory_space<vmem>>, %arg7: memref<16x128xf32, #tpu.memory_space<vmem>>) attributes {dimension_semantics = [#tpu.dimension_semantics<parallel>, #tpu.dimension_semantics<parallel>], iteration_bounds = array<i64: 1, 1>, scalar_prefetch = 0 : i64, scratch_operands = 0 : i64, tpu.core_type = #tpu.core_type<tc>, window_params = [{transform_indices = @transform_0, window_bounds = array<i64: 16, 32>}, {pipeline_mode = #tpu.pipeline_mode<synchronous>, transform_indices = @transform_1, window_bounds = array<i64: 1, 32>}, {pipeline_mode = #tpu.pipeline_mode<synchronous>, transform_indices = @transform_2, window_bounds = array<i64: 1, 32>}, {transform_indices = @transform_3, window_bounds = array<i64: 32, 128>}, {transform_indices = @transform_4, window_bounds = array<i64: 1, 128>}, {transform_indices = @transform_5, window_bounds = array<i64: 16, 128>}]} {
    %c0 = arith.constant 0 : index
    %c0_0 = arith.constant 0 : index
    %0 = vector.load %arg2[%c0, %c0_0] : memref<16x32xf32, #tpu.memory_space<vmem>>, vector<16x32xf32>
    %c0_1 = arith.constant 0 : index
    %c0_2 = arith.constant 0 : index
    %1 = vector.load %arg3[%c0_1, %c0_2] : memref<1x32xf32, #tpu.memory_space<vmem>>, vector<1x32xf32>
    %c0_3 = arith.constant 0 : index
    %c0_4 = arith.constant 0 : index
    %2 = vector.load %arg4[%c0_3, %c0_4] : memref<1x32xf32, #tpu.memory_space<vmem>>, vector<1x32xf32>
    %cst = arith.constant dense<0.000000e+00> : vector<16xf32>
    %3 = vector.multi_reduction <add>, %0, %cst [1] : vector<16x32xf32> to vector<16xf32>
    %4 = vector.shape_cast %3 : vector<16xf32> to vector<16x1xf32>
    %cst_5 = arith.constant 3.200000e+01 : f32
    %5 = vector.broadcast %cst_5 : f32 to vector<16x1xf32>
    %6 = arith.divf %4, %5 : vector<16x1xf32>
    %7 = vector.broadcast %6 : vector<16x1xf32> to vector<16x32xf32>
    %8 = arith.subf %0, %7 : vector<16x32xf32>
    %9 = arith.mulf %8, %8 : vector<16x32xf32>
    %cst_6 = arith.constant dense<0.000000e+00> : vector<16xf32>
    %10 = vector.multi_reduction <add>, %9, %cst_6 [1] : vector<16x32xf32> to vector<16xf32>
    %11 = vector.shape_cast %10 : vector<16xf32> to vector<16x1xf32>
    %cst_7 = arith.constant 3.200000e+01 : f32
    %12 = vector.broadcast %cst_7 : f32 to vector<16x1xf32>
    %13 = arith.divf %11, %12 : vector<16x1xf32>
    %14 = vector.broadcast %6 : vector<16x1xf32> to vector<16x32xf32>
    %15 = arith.subf %0, %14 : vector<16x32xf32>
    %cst_8 = arith.constant 9.99999974E-6 : f32
    %16 = vector.broadcast %cst_8 : f32 to vector<16x1xf32>
    %17 = arith.addf %13, %16 : vector<16x1xf32>
    %18 = math.rsqrt %17 : vector<16x1xf32>
    %19 = vector.broadcast %18 : vector<16x1xf32> to vector<16x32xf32>
    %20 = arith.mulf %15, %19 : vector<16x32xf32>
    %21 = vector.broadcast %1 : vector<1x32xf32> to vector<16x32xf32>
    %22 = arith.mulf %20, %21 : vector<16x32xf32>
    %23 = vector.broadcast %2 : vector<1x32xf32> to vector<16x32xf32>
    %24 = arith.addf %22, %23 : vector<16x32xf32>
    %25 = arith.truncf %24 : vector<16x32xf32> to vector<16x32xbf16>
    %c0_9 = arith.constant 0 : index
    %c0_10 = arith.constant 0 : index
    %26 = vector.load %arg5[%c0_9, %c0_10] : memref<32x128xbf16, #tpu.memory_space<vmem>>, vector<32x128xbf16>
    %cst_11 = arith.constant dense<0.000000e+00> : vector<16x128xf32>
    %27 = tpu.matmul %25, %26, %cst_11 {dimension_numbers = #tpu.dot_dimension_numbers<[1], [0], [0], [1], [0, 0, 1, 1], [], []>} : vector<16x32xbf16>, vector<32x128xbf16>, vector<16x128xf32> -> vector<16x128xf32>
    %c0_12 = arith.constant 0 : index
    %c0_13 = arith.constant 0 : index
    %28 = vector.load %arg6[%c0_12, %c0_13] : memref<1x128xf32, #tpu.memory_space<vmem>>, vector<1x128xf32>
    %29 = vector.broadcast %28 : vector<1x128xf32> to vector<16x128xf32>
    %30 = arith.addf %27, %29 : vector<16x128xf32>
    %cst_14 = arith.constant 5.000000e-01 : f32
    %31 = vector.broadcast %cst_14 : f32 to vector<16x128xf32>
    %32 = arith.mulf %31, %30 : vector<16x128xf32>
    %cst_15 = arith.constant 4.471500e-02 : f32
    %33 = vector.broadcast %cst_15 : f32 to vector<16x128xf32>
    %34 = arith.mulf %33, %30 : vector<16x128xf32>
    %35 = arith.mulf %34, %30 : vector<16x128xf32>
    %36 = arith.mulf %35, %30 : vector<16x128xf32>
    %37 = arith.addf %30, %36 : vector<16x128xf32>
    %cst_16 = arith.constant 0.797884583 : f32
    %38 = vector.broadcast %cst_16 : f32 to vector<16x128xf32>
    %39 = arith.mulf %38, %37 : vector<16x128xf32>
    %40 = math.tanh %39 : vector<16x128xf32>
    %cst_17 = arith.constant 1.000000e+00 : f32
    %41 = vector.broadcast %cst_17 : f32 to vector<16x128xf32>
    %42 = arith.addf %41, %40 : vector<16x128xf32>
    %43 = arith.mulf %32, %42 : vector<16x128xf32>
    %c0_18 = arith.constant 0 : index
    %c0_19 = arith.constant 0 : index
    %44 = vector.load %arg7[%c0_18, %c0_19] : memref<16x128xf32, #tpu.memory_space<vmem>>, vector<16x128xf32>
    tpu.vector_store %arg7[%c0_18, %c0_19], %43 {strides = array<i32>} : memref<16x128xf32, #tpu.memory_space<vmem>>, vector<16x128xf32>,
    return
  }
  func.func @transform_0(%arg0: i32, %arg1: i32) -> (i32, i32) {
    %c0_i32 = arith.constant 0 : i32
    %c0_i32_0 = arith.constant 0 : i32
    return %arg0, %c0_i32 : i32, i32
  }
  func.func @transform_1(%arg0: i32, %arg1: i32) -> (i32, i32) {
    %c0_i32 = arith.constant 0 : i32
    %c0_i32_0 = arith.constant 0 : i32
    %c0_i32_1 = arith.constant 0 : i32
    return %c0_i32, %c0_i32_0 : i32, i32
  }
  func.func @transform_2(%arg0: i32, %arg1: i32) -> (i32, i32) {
    %c0_i32 = arith.constant 0 : i32
    %c0_i32_0 = arith.constant 0 : i32
    %c0_i32_1 = arith.constant 0 : i32
    return %c0_i32, %c0_i32_0 : i32, i32
  }
  func.func @transform_3(%arg0: i32, %arg1: i32) -> (i32, i32) {
    %c0_i32 = arith.constant 0 : i32
    %c0_i32_0 = arith.constant 0 : i32
    return %c0_i32, %arg1 : i32, i32
  }
  func.func @transform_4(%arg0: i32, %arg1: i32) -> (i32, i32) {
    %c0_i32 = arith.constant 0 : i32
    %c0_i32_0 = arith.constant 0 : i32
    return %c0_i32, %arg1 : i32, i32
  }
  func.func @transform_5(%arg0: i32, %arg1: i32) -> (i32, i32) {
    %c0_i32 = arith.constant 0 : i32
    return %arg0, %arg1 : i32, i32
  }
}

module attributes {stable_mosaic.version = 11 : i64} {
  func.func @_fused_linear_kernel(%arg0: i32, %arg1: i32, %arg2: memref<16x128xf32, #tpu.memory_space<vmem>>, %arg3: memref<128x32xbf16, #tpu.memory_space<vmem>>, %arg4: memref<1x32xf32, #tpu.memory_space<vmem>>, %arg5: memref<16x32xf32, #tpu.memory_space<vmem>>, %arg6: memref<16x32xf32, #tpu.memory_space<vmem>>) attributes {dimension_semantics = [#tpu.dimension_semantics<parallel>, #tpu.dimension_semantics<parallel>], iteration_bounds = array<i64: 1, 1>, scalar_prefetch = 0 : i64, scratch_operands = 0 : i64, tpu.core_type = #tpu.core_type<tc>, window_params = [{transform_indices = @transform_0, window_bounds = array<i64: 16, 128>}, {transform_indices = @transform_1, window_bounds = array<i64: 128, 32>}, {transform_indices = @transform_2, window_bounds = array<i64: 1, 32>}, {transform_indices = @transform_3, window_bounds = array<i64: 16, 32>}, {transform_indices = @transform_4, window_bounds = array<i64: 16, 32>}]} {
    %c0 = arith.constant 0 : index
    %c0_0 = arith.constant 0 : index
    %0 = vector.load %arg2[%c0, %c0_0] : memref<16x128xf32, #tpu.memory_space<vmem>>, vector<16x128xf32>
    %1 = arith.truncf %0 : vector<16x128xf32> to vector<16x128xbf16>
    %c0_1 = arith.constant 0 : index
    %c0_2 = arith.constant 0 : index
    %2 = vector.load %arg3[%c0_1, %c0_2] : memref<128x32xbf16, #tpu.memory_space<vmem>>, vector<128x32xbf16>
    %cst = arith.constant dense<0.000000e+00> : vector<16x32xf32>
    %3 = tpu.matmul %1, %2, %cst {dimension_numbers = #tpu.dot_dimension_numbers<[1], [0], [0], [1], [0, 0, 1, 1], [], []>} : vector<16x128xbf16>, vector<128x32xbf16>, vector<16x32xf32> -> vector<16x32xf32>
    %c0_3 = arith.constant 0 : index
    %c0_4 = arith.constant 0 : index
    %4 = vector.load %arg4[%c0_3, %c0_4] : memref<1x32xf32, #tpu.memory_space<vmem>>, vector<1x32xf32>
    %5 = vector.broadcast %4 : vector<1x32xf32> to vector<16x32xf32>
    %6 = arith.addf %3, %5 : vector<16x32xf32>
    %c0_5 = arith.constant 0 : index
    %c0_6 = arith.constant 0 : index
    %7 = vector.load %arg5[%c0_5, %c0_6] : memref<16x32xf32, #tpu.memory_space<vmem>>, vector<16x32xf32>
    %8 = arith.addf %6, %7 : vector<16x32xf32>
    %c0_7 = arith.constant 0 : index
    %c0_8 = arith.constant 0 : index
    %9 = vector.load %arg6[%c0_7, %c0_8] : memref<16x32xf32, #tpu.memory_space<vmem>>, vector<16x32xf32>
    tpu.vector_store %arg6[%c0_7, %c0_8], %8 {strides = array<i32>} : memref<16x32xf32, #tpu.memory_space<vmem>>, vector<16x32xf32>,
    return
  }
  func.func @transform_0(%arg0: i32, %arg1: i32) -> (i32, i32) {
    %c0_i32 = arith.constant 0 : i32
    %c0_i32_0 = arith.constant 0 : i32
    return %arg0, %c0_i32 : i32, i32
  }
  func.func @transform_1(%arg0: i32, %arg1: i32) -> (i32, i32) {
    %c0_i32 = arith.constant 0 : i32
    %c0_i32_0 = arith.constant 0 : i32
    return %c0_i32, %arg1 : i32, i32
  }
  func.func @transform_2(%arg0: i32, %arg1: i32) -> (i32, i32) {
    %c0_i32 = arith.constant 0 : i32
    %c0_i32_0 = arith.constant 0 : i32
    return %c0_i32, %arg1 : i32, i32
  }
  func.func @transform_3(%arg0: i32, %arg1: i32) -> (i32, i32) {
    %c0_i32 = arith.constant 0 : i32
    return %arg0, %arg1 : i32, i32
  }
  func.func @transform_4(%arg0: i32, %arg1: i32) -> (i32, i32) {
    %c0_i32 = arith.constant 0 : i32
    return %arg0, %arg1 : i32, i32
  }
}

module attributes {stable_mosaic.version = 11 : i64} {
  func.func @_fused_linear_kernel(%arg0: i32, %arg1: i32, %arg2: memref<16x32xf32, #tpu.memory_space<vmem>>, %arg3: memref<1x32xf32, #tpu.memory_space<vmem>>, %arg4: memref<1x32xf32, #tpu.memory_space<vmem>>, %arg5: memref<32x128xbf16, #tpu.memory_space<vmem>>, %arg6: memref<16x128xf32, #tpu.memory_space<vmem>>) attributes {dimension_semantics = [#tpu.dimension_semantics<parallel>, #tpu.dimension_semantics<parallel>], iteration_bounds = array<i64: 1, 1>, scalar_prefetch = 0 : i64, scratch_operands = 0 : i64, tpu.core_type = #tpu.core_type<tc>, window_params = [{transform_indices = @transform_0, window_bounds = array<i64: 16, 32>}, {pipeline_mode = #tpu.pipeline_mode<synchronous>, transform_indices = @transform_1, window_bounds = array<i64: 1, 32>}, {pipeline_mode = #tpu.pipeline_mode<synchronous>, transform_indices = @transform_2, window_bounds = array<i64: 1, 32>}, {transform_indices = @transform_3, window_bounds = array<i64: 32, 128>}, {transform_indices = @transform_4, window_bounds = array<i64: 16, 128>}]} {
    %c0 = arith.constant 0 : index
    %c0_0 = arith.constant 0 : index
    %0 = vector.load %arg2[%c0, %c0_0] : memref<16x32xf32, #tpu.memory_space<vmem>>, vector<16x32xf32>
    %c0_1 = arith.constant 0 : index
    %c0_2 = arith.constant 0 : index
    %1 = vector.load %arg3[%c0_1, %c0_2] : memref<1x32xf32, #tpu.memory_space<vmem>>, vector<1x32xf32>
    %c0_3 = arith.constant 0 : index
    %c0_4 = arith.constant 0 : index
    %2 = vector.load %arg4[%c0_3, %c0_4] : memref<1x32xf32, #tpu.memory_space<vmem>>, vector<1x32xf32>
    %cst = arith.constant dense<0.000000e+00> : vector<16xf32>
    %3 = vector.multi_reduction <add>, %0, %cst [1] : vector<16x32xf32> to vector<16xf32>
    %4 = vector.shape_cast %3 : vector<16xf32> to vector<16x1xf32>
    %cst_5 = arith.constant 3.200000e+01 : f32
    %5 = vector.broadcast %cst_5 : f32 to vector<16x1xf32>
    %6 = arith.divf %4, %5 : vector<16x1xf32>
    %7 = vector.broadcast %6 : vector<16x1xf32> to vector<16x32xf32>
    %8 = arith.subf %0, %7 : vector<16x32xf32>
    %9 = arith.mulf %8, %8 : vector<16x32xf32>
    %cst_6 = arith.constant dense<0.000000e+00> : vector<16xf32>
    %10 = vector.multi_reduction <add>, %9, %cst_6 [1] : vector<16x32xf32> to vector<16xf32>
    %11 = vector.shape_cast %10 : vector<16xf32> to vector<16x1xf32>
    %cst_7 = arith.constant 3.200000e+01 : f32
    %12 = vector.broadcast %cst_7 : f32 to vector<16x1xf32>
    %13 = arith.divf %11, %12 : vector<16x1xf32>
    %14 = vector.broadcast %6 : vector<16x1xf32> to vector<16x32xf32>
    %15 = arith.subf %0, %14 : vector<16x32xf32>
    %cst_8 = arith.constant 9.99999974E-6 : f32
    %16 = vector.broadcast %cst_8 : f32 to vector<16x1xf32>
    %17 = arith.addf %13, %16 : vector<16x1xf32>
    %18 = math.rsqrt %17 : vector<16x1xf32>
    %19 = vector.broadcast %18 : vector<16x1xf32> to vector<16x32xf32>
    %20 = arith.mulf %15, %19 : vector<16x32xf32>
    %21 = vector.broadcast %1 : vector<1x32xf32> to vector<16x32xf32>
    %22 = arith.mulf %20, %21 : vector<16x32xf32>
    %23 = vector.broadcast %2 : vector<1x32xf32> to vector<16x32xf32>
    %24 = arith.addf %22, %23 : vector<16x32xf32>
    %25 = arith.truncf %24 : vector<16x32xf32> to vector<16x32xbf16>
    %c0_9 = arith.constant 0 : index
    %c0_10 = arith.constant 0 : index
    %26 = vector.load %arg5[%c0_9, %c0_10] : memref<32x128xbf16, #tpu.memory_space<vmem>>, vector<32x128xbf16>
    %cst_11 = arith.constant dense<0.000000e+00> : vector<16x128xf32>
    %27 = tpu.matmul %25, %26, %cst_11 {dimension_numbers = #tpu.dot_dimension_numbers<[1], [0], [0], [1], [0, 0, 1, 1], [], []>} : vector<16x32xbf16>, vector<32x128xbf16>, vector<16x128xf32> -> vector<16x128xf32>
    %c0_12 = arith.constant 0 : index
    %c0_13 = arith.constant 0 : index
    %28 = vector.load %arg6[%c0_12, %c0_13] : memref<16x128xf32, #tpu.memory_space<vmem>>, vector<16x128xf32>
    tpu.vector_store %arg6[%c0_12, %c0_13], %27 {strides = array<i32>} : memref<16x128xf32, #tpu.memory_space<vmem>>, vector<16x128xf32>,
    return
  }
  func.func @transform_0(%arg0: i32, %arg1: i32) -> (i32, i32) {
    %c0_i32 = arith.constant 0 : i32
    %c0_i32_0 = arith.constant 0 : i32
    return %arg0, %c0_i32 : i32, i32
  }
  func.func @transform_1(%arg0: i32, %arg1: i32) -> (i32, i32) {
    %c0_i32 = arith.constant 0 : i32
    %c0_i32_0 = arith.constant 0 : i32
    %c0_i32_1 = arith.constant 0 : i32
    return %c0_i32, %c0_i32_0 : i32, i32
  }
  func.func @transform_2(%arg0: i32, %arg1: i32) -> (i32, i32) {
    %c0_i32 = arith.constant 0 : i32
    %c0_i32_0 = arith.constant 0 : i32
    %c0_i32_1 = arith.constant 0 : i32
    return %c0_i32, %c0_i32_0 : i32, i32
  }
  func.func @transform_3(%arg0: i32, %arg1: i32) -> (i32, i32) {
    %c0_i32 = arith.constant 0 : i32
    %c0_i32_0 = arith.constant 0 : i32
    return %c0_i32, %arg1 : i32, i32
  }
  func.func @transform_4(%arg0: i32, %arg1: i32) -> (i32, i32) {
    %c0_i32 = arith.constant 0 : i32
    return %arg0, %arg1 : i32, i32
  }
}

</mosaic_0001>

<llo_original>
// kernel: gpt_forward.11
$region0: #{gpt_forward.11}
  #allocation0 [shape = 'u32[]', space=smem, size = 0x4, offset = 0x4, fixed_abs, tag = 'smem constant byte address 0x4 - core index']
  #allocation1 [shape = 'u32[144,128]{1,0:T(1,128)}', space=vmem, size = 0x12000, scoped, tag = 'internal scratch']
  %s0 = inlined_call_operand.vmem [shape: f32[16,32], index: 0, kind: input, shape index: {}]
  %s1 = inlined_call_operand.vmem [shape: f32[1,32], index: 1, kind: input, shape index: {}]
  %s2 = inlined_call_operand.vmem [shape: f32[1,32], index: 2, kind: input, shape index: {}]
  %s3 = inlined_call_operand.vmem [shape: bf16[32,96], index: 3, kind: input, shape index: {}]
  %s4 = inlined_call_operand.vmem [shape: f32[1,96], index: 4, kind: input, shape index: {}]
  %s5 = inlined_call_operand.vmem [shape: f32[16,96], index: 5, kind: output, shape index: {}]
  %s6 = sld [smem:[#allocation0]]
  $region30: #{gpt_forward.11} parent=0
    _
  %s8 = ssub.s32 1, %s6
  %s9 = scalar_select 0, %s8, %s6
  // Predicated region
  $region2: #{gpt_forward.11} parent=0 // pred_check
    _
  $region3: #{gpt_forward.11} parent=0 // pred_check_branch
    %11 = sbr.rel (0) target = $region5
  $region4: #{gpt_forward.11} parent=0 // pred_region
    _
  $region5: #{gpt_forward.11} parent=0 // pred_fallthru
    _
  // Predicated region
  $region6: #{gpt_forward.11} parent=0 // pred_check
    _
  $region7: #{gpt_forward.11} parent=0 // pred_check_branch
    %13 = sbr.rel (0) target = $region9
  $region8: #{gpt_forward.11} parent=0 // pred_region
    _
  $region9: #{gpt_forward.11} parent=0 // pred_fallthru
    _
  // Predicated region
  $region10: #{gpt_forward.11} parent=0 // pred_check
    _
  $region11: #{gpt_forward.11} parent=0 // pred_check_branch
    %15 = sbr.rel (0) target = $region13
  $region12: #{gpt_forward.11} parent=0 // pred_region
    _
  $region13: #{gpt_forward.11} parent=0 // pred_fallthru
    _
  // Predicated region
  $region14: #{gpt_forward.11} parent=0 // pred_check
    _
  $region15: #{gpt_forward.11} parent=0 // pred_check_branch
    %17 = sbr.rel (0) target = $region17
  $region16: #{gpt_forward.11} parent=0 // pred_region
    _
  $region17: #{gpt_forward.11} parent=0 // pred_fallthru
    _
  // Predicated region
  $region18: #{gpt_forward.11} parent=0 // pred_check
    _
  $region19: #{gpt_forward.11} parent=0 // pred_check_branch
    %19 = sbr.rel (0) target = $region21
  $region20: #{gpt_forward.11} parent=0 // pred_region
    _
  $region21: #{gpt_forward.11} parent=0 // pred_fallthru
    _
  %v21 = vld [vmem:[%s0] sm:$0xff]
  %v22 = vld [vmem:[%s0 + $0x8] sm:$0xff]
  %v23 = vld [vmem:[%s1] sm:$0x1]
  %v24 = vld [vmem:[%s2] sm:$0x1]
  %vm25 = vcmask 261120
  %v26 = vsel %vm25, %v21, 0.0
  %27 = vadd.xlane.f32.xlu0 %v26
  %v28 = vpop.xlane.xlu0 %27
  %v29 = vsel %vm25, %v22, 0.0
  %30 = vadd.xlane.f32.xlu0 %v29
  %v31 = vpop.xlane.xlu0 %30
  %v32 = vrcp.pop 32.0
  %v33 = vmul.f32 %v28, %v32
  %v34 = vmul.f32 %v31, %v32
  %v35 = vsub.f32 %v21, %v33
  %v36 = vsub.f32 %v22, %v34
  %v37 = vmul.f32 %v35, %v35
  %v38 = vmul.f32 %v36, %v36
  %v39 = vsel %vm25, %v37, 0.0
  %40 = vadd.xlane.f32.xlu0 %v39
  %v41 = vpop.xlane.xlu0 %40
  %v42 = vsel %vm25, %v38, 0.0
  %43 = vadd.xlane.f32.xlu0 %v42
  %v44 = vpop.xlane.xlu0 %43
  %v45 = vmul.f32 %v41, %v32
  %v46 = vmul.f32 %v44, %v32
  %v47 = vadd.f32 %v45, 1e-05
  %v48 = vadd.f32 %v46, 1e-05
  %v49 = vrsqrt.pop %v47
  %v50 = vrsqrt.pop %v48
  %v51 = vmul.f32 %v35, %v49
  %v52 = vmul.f32 %v36, %v50
  %v54 = vlaneseq
  %v55 = vshrl.u32 %v54, 7
  %v56 = vsub.s32 0, %v55
  %v57 = vrot.slane %v23, %v56
  %v59 = vmul.f32 %v51, %v57
  %v60 = vmul.f32 %v52, %v57
  %v62 = vlaneseq
  %v63 = vshrl.u32 %v62, 7
  %v64 = vsub.s32 0, %v63
  %v65 = vrot.slane %v24, %v64
  %v67 = vadd.f32 %v59, %v65
  %v68 = vadd.f32 %v60, %v65
  %v69 = vpack.c.bf16 %v68, %v67
  %v70 = vld [vmem:[%s3] sm:$0xf]
  %v71 = vld [vmem:[%s3 + $0x4] sm:$0xf]
  %v72 = vld [vmem:[%s3 + $0x8] sm:$0xf]
  %v73 = vld [vmem:[%s3 + $0xc] sm:$0xf]
  %v74 = vld [vmem:[%s4] sm:$0x1]
  %v76 = vlaneseq
  %v77 = vshrl.u32 %v76, 7
  %v78 = vsub.s32 0, %v77
  %v79 = vrot.slane %v74, %v78
  %v85 = vunpack.c.l.b16 %v70
  %v86 = vunpack.c.l.b16 %v71
  %v87 = vunpack.c.l.b16 %v72
  %v88 = vunpack.c.l.b16 %v73
  %v89 = vpack.c.b16 %v86, %v85
  %v90 = vpack.c.b16 %v88, %v87
  %v94 = vsel %vm25, %v69, 0
  %96 = vmatprep.subr.bf16.mxu0 0
  %97 = vmatpush1.bf16.msra.mxu0 %v89
  %98 = vmatprep.subr.bf16.mxu0 0
  %99 = vmatpush1.bf16.msra.mxu0 %v90
  %100 = vmatprep.subr.bf16.mxu0 0
  %101 = vmatpush1.bf16.msra.mxu0 0
  %102 = vmatprep.subr.bf16.mxu0 0
  %103 = vmatpush1.bf16.msra.mxu0 0
  %104 = vmatprep.subr.bf16.mxu0 0
  %105 = vmatpush1.bf16.msra.mxu0 0
  %106 = vmatprep.subr.bf16.mxu0 0
  %107 = vmatpush1.bf16.msra.mxu0 0
  %108 = vmatprep.subr.bf16.mxu0 0
  %109 = vmatpush1.bf16.msra.mxu0 0
  %110 = vmatprep.subr.bf16.mxu0 0
  %111 = vmatpush1.bf16.msra.mxu0 0
  %112 = vmatprep.subr.bf16.mxu0 0
  %113 = vmatpush1.bf16.msra.mxu0 0
  %114 = vmatprep.subr.bf16.mxu0 0
  %115 = vmatpush1.bf16.msra.mxu0 0
  %116 = vmatprep.subr.bf16.mxu0 0
  %117 = vmatpush1.bf16.msra.mxu0 0
  %118 = vmatprep.subr.bf16.mxu0 0
  %119 = vmatpush1.bf16.msra.mxu0 0
  %120 = vmatprep.subr.bf16.mxu0 0
  %121 = vmatpush1.bf16.msra.mxu0 0
  %122 = vmatprep.subr.bf16.mxu0 0
  %123 = vmatpush1.bf16.msra.mxu0 0
  %124 = vmatprep.subr.bf16.mxu0 0
  %125 = vmatpush1.bf16.msra.mxu0 0
  %126 = vmatprep.subr.bf16.mxu0 0
  %127 = vmatpush1.bf16.msra.mxu0 0
  %128 = vmatprep.mubr.bf16.mxu0 0
  %129 = vmatmul.mubr.bf16.gmra.mrb[0].mxu0 %v94
  %v130 = vpop.f32.mrb[0].mxu0
  %v131 = vadd.f32 %v79, %v130
  %v132 = vpop.f32.mrb[0].mxu0
  %v133 = vpop.f32.mrb[0].mxu0
  %v134 = vadd.f32 %v79, %v133
  %v135 = vpop.f32.mrb[0].mxu0
  %136 = vdwg.mxu0
  %vm137 = vcmask 785408
  %138 = vst.msk [vmem:[%s5] sm:$0xff] %vm137, %v131
  %139 = vst.msk [vmem:[%s5 + $0x8] sm:$0xff] %vm137, %v134
  // Predicated region
  $region22: #{gpt_forward.11} parent=0 // pred_check
    _
  $region23: #{gpt_forward.11} parent=0 // pred_check_branch
    %141 = sbr.rel (0) target = $region25
  $region24: #{gpt_forward.11} parent=0 // pred_region
    _
  $region25: #{gpt_forward.11} parent=0 // pred_fallthru
    _
  // Predicated region
  $region26: #{gpt_forward.11} parent=0 // pred_check
    _
  $region27: #{gpt_forward.11} parent=0 // pred_check_branch
    %143 = sbr.rel (0) target = $region29
  $region28: #{gpt_forward.11} parent=0 // pred_region
    _
  $region29: #{gpt_forward.11} parent=0 // pred_fallthru
    _

// kernel: gpt_forward.13
$region0: #{gpt_forward.13}
  #allocation0 [shape = 'u32[]', space=smem, size = 0x4, offset = 0x4, fixed_abs, tag = 'smem constant byte address 0x4 - core index']
  #allocation1 [shape = 'u32[144,128]{1,0:T(1,128)}', space=vmem, size = 0x12000, scoped, tag = 'internal scratch']
  %s0 = inlined_call_operand.vmem [shape: f32[16,32], index: 0, kind: input, shape index: {}]
  %s1 = inlined_call_operand.vmem [shape: bf16[32,32], index: 1, kind: input, shape index: {}]
  %s2 = inlined_call_operand.vmem [shape: f32[1,32], index: 2, kind: input, shape index: {}]
  %s3 = inlined_call_operand.vmem [shape: f32[16,32], index: 3, kind: input, shape index: {}]
  %s4 = inlined_call_operand.vmem [shape: f32[16,32], index: 4, kind: output, shape index: {}]
  %s5 = sld [smem:[#allocation0]]
  $region26: #{gpt_forward.13} parent=0
    _
  %s7 = ssub.s32 1, %s5
  %s8 = scalar_select 0, %s7, %s5
  // Predicated region
  $region2: #{gpt_forward.13} parent=0 // pred_check
    _
  $region3: #{gpt_forward.13} parent=0 // pred_check_branch
    %10 = sbr.rel (0) target = $region5
  $region4: #{gpt_forward.13} parent=0 // pred_region
    _
  $region5: #{gpt_forward.13} parent=0 // pred_fallthru
    _
  // Predicated region
  $region6: #{gpt_forward.13} parent=0 // pred_check
    _
  $region7: #{gpt_forward.13} parent=0 // pred_check_branch
    %12 = sbr.rel (0) target = $region9
  $region8: #{gpt_forward.13} parent=0 // pred_region
    _
  $region9: #{gpt_forward.13} parent=0 // pred_fallthru
    _
  // Predicated region
  $region10: #{gpt_forward.13} parent=0 // pred_check
    _
  $region11: #{gpt_forward.13} parent=0 // pred_check_branch
    %14 = sbr.rel (0) target = $region13
  $region12: #{gpt_forward.13} parent=0 // pred_region
    _
  $region13: #{gpt_forward.13} parent=0 // pred_fallthru
    _
  // Predicated region
  $region14: #{gpt_forward.13} parent=0 // pred_check
    _
  $region15: #{gpt_forward.13} parent=0 // pred_check_branch
    %16 = sbr.rel (0) target = $region17
  $region16: #{gpt_forward.13} parent=0 // pred_region
    _
  $region17: #{gpt_forward.13} parent=0 // pred_fallthru
    _
  %v18 = vld [vmem:[%s0] sm:$0xff]
  %v19 = vld [vmem:[%s0 + $0x8] sm:$0xff]
  %v20 = vpack.c.bf16 %v19, %v18
  %v21 = vld [vmem:[%s1] sm:$0xf]
  %v22 = vld [vmem:[%s1 + $0x4] sm:$0xf]
  %v23 = vld [vmem:[%s1 + $0x8] sm:$0xf]
  %v24 = vld [vmem:[%s1 + $0xc] sm:$0xf]
  %v25 = vld [vmem:[%s2] sm:$0x1]
  %v27 = vlaneseq
  %v28 = vshrl.u32 %v27, 7
  %v29 = vsub.s32 0, %v28
  %v30 = vrot.slane %v25, %v29
  %v36 = vunpack.c.l.b16 %v21
  %v37 = vunpack.c.l.b16 %v22
  %v38 = vunpack.c.l.b16 %v23
  %v39 = vunpack.c.l.b16 %v24
  %v40 = vpack.c.b16 %v37, %v36
  %v41 = vpack.c.b16 %v39, %v38
  %vm44 = vcmask 261120
  %v46 = vsel %vm44, %v20, 0
  %48 = vmatprep.subr.bf16.mxu0 0
  %49 = vmatpush1.bf16.msra.mxu0 %v40
  %50 = vmatprep.subr.bf16.mxu0 0
  %51 = vmatpush1.bf16.msra.mxu0 %v41
  %52 = vmatprep.subr.bf16.mxu0 0
  %53 = vmatpush1.bf16.msra.mxu0 0
  %54 = vmatprep.subr.bf16.mxu0 0
  %55 = vmatpush1.bf16.msra.mxu0 0
  %56 = vmatprep.subr.bf16.mxu0 0
  %57 = vmatpush1.bf16.msra.mxu0 0
  %58 = vmatprep.subr.bf16.mxu0 0
  %59 = vmatpush1.bf16.msra.mxu0 0
  %60 = vmatprep.subr.bf16.mxu0 0
  %61 = vmatpush1.bf16.msra.mxu0 0
  %62 = vmatprep.subr.bf16.mxu0 0
  %63 = vmatpush1.bf16.msra.mxu0 0
  %64 = vmatprep.subr.bf16.mxu0 0
  %65 = vmatpush1.bf16.msra.mxu0 0
  %66 = vmatprep.subr.bf16.mxu0 0
  %67 = vmatpush1.bf16.msra.mxu0 0
  %68 = vmatprep.subr.bf16.mxu0 0
  %69 = vmatpush1.bf16.msra.mxu0 0
  %70 = vmatprep.subr.bf16.mxu0 0
  %71 = vmatpush1.bf16.msra.mxu0 0
  %72 = vmatprep.subr.bf16.mxu0 0
  %73 = vmatpush1.bf16.msra.mxu0 0
  %74 = vmatprep.subr.bf16.mxu0 0
  %75 = vmatpush1.bf16.msra.mxu0 0
  %76 = vmatprep.subr.bf16.mxu0 0
  %77 = vmatpush1.bf16.msra.mxu0 0
  %78 = vmatprep.subr.bf16.mxu0 0
  %79 = vmatpush1.bf16.msra.mxu0 0
  %80 = vmatprep.mubr.bf16.mxu0 0
  %81 = vmatmul.mubr.bf16.gmra.mrb[0].mxu0 %v46
  %v82 = vpop.f32.mrb[0].mxu0
  %v83 = vadd.f32 %v30, %v82
  %v84 = vpop.f32.mrb[0].mxu0
  %v85 = vpop.f32.mrb[0].mxu0
  %v86 = vadd.f32 %v30, %v85
  %v87 = vpop.f32.mrb[0].mxu0
  %88 = vdwg.mxu0
  %v89 = vld [vmem:[%s3] sm:$0xff]
  %v90 = vld [vmem:[%s3 + $0x8] sm:$0xff]
  %v91 = vadd.f32 %v83, %v89
  %v92 = vadd.f32 %v86, %v90
  %93 = vst.msk [vmem:[%s4] sm:$0xff] %vm44, %v91
  %94 = vst.msk [vmem:[%s4 + $0x8] sm:$0xff] %vm44, %v92
  // Predicated region
  $region18: #{gpt_forward.13} parent=0 // pred_check
    _
  $region19: #{gpt_forward.13} parent=0 // pred_check_branch
    %96 = sbr.rel (0) target = $region21
  $region20: #{gpt_forward.13} parent=0 // pred_region
    _
  $region21: #{gpt_forward.13} parent=0 // pred_fallthru
    _
  // Predicated region
  $region22: #{gpt_forward.13} parent=0 // pred_check
    _
  $region23: #{gpt_forward.13} parent=0 // pred_check_branch
    %98 = sbr.rel (0) target = $region25
  $region24: #{gpt_forward.13} parent=0 // pred_region
    _
  $region25: #{gpt_forward.13} parent=0 // pred_fallthru
    _

// kernel: gpt_forward.12
$region0: #{gpt_forward.12}
  #allocation0 [shape = 'u32[]', space=smem, size = 0x4, offset = 0x4, fixed_abs, tag = 'smem constant byte address 0x4 - core index']
  #allocation1 [shape = 'u32[144,128]{1,0:T(1,128)}', space=vmem, size = 0x12000, scoped, tag = 'internal scratch']
  #allocation2 [shape = 'f32[2,8,1]{2,1,0:T(8,128)}', space=vmem, size = 0x2000, scoped, tag = 'scratch operand']
  #allocation3 [shape = 'f32[2,8,1]{2,1,0:T(8,128)}', space=vmem, size = 0x2000, scoped, tag = 'scratch operand']
  #allocation4 [shape = 'f32[2,8,16]{2,1,0:T(8,128)}', space=vmem, size = 0x2000, scoped, tag = 'scratch operand']
  %s0 = inlined_call_operand.vmem [shape: bf16[2,2,8,16], index: 0, kind: input, shape index: {}]
  %s1 = inlined_call_operand.vmem [shape: bf16[2,2,8,16], index: 1, kind: input, shape index: {}]
  %s2 = inlined_call_operand.vmem [shape: bf16[2,2,8,16], index: 2, kind: input, shape index: {}]
  %s3 = inlined_call_operand.vmem [shape: f32[2,2,8,16], index: 3, kind: output, shape index: {}]
  %s4 = sld [smem:[#allocation0]]
  $region57: #{gpt_forward.12} parent=0
    _
  %s6 = ssub.s32 1, %s4
  %s7 = scalar_select 0, %s6, %s4
  loop: start=0, step=1, limit=4
  $region2: #{gpt_forward.12} parent=0 // loop_pre_header
    _
  $region3: #{gpt_forward.12} parent=0 // loop_header
    %s9 = sphi 0, %s13
    %p10 = scmp.ge.s32.totalorder %s9, 4
    %s16 = sphi 0, %s35
    %s17 = sphi 0, %s31
    %s18 = sphi 0, %s27
    %s19 = sphi 0, %s16
    %s20 = sphi 0, %s17
    %s21 = sphi 0, %s18
    %s22 = sphi 0, %s19
    %s23 = sphi 0, %s20
    %s24 = sphi 0, %s21
    %s40 = sphi 0, %s42
    %s43 = sphi 0, %s40
    %s44 = sphi 0, %s43
    %s60 = sphi 0, %s44
    %s68 = sphi 0, %s70
    %s71 = sphi 0, %s68
    %s72 = sphi 0, %s71
    %s88 = sphi 0, %s72
    %s96 = sphi 0, %s98
    %s99 = sphi 0, %s96
    %s100 = sphi 0, %s99
    %s116 = sphi 0, %s100
    %s124 = sphi 0, %s126
    %s127 = sphi 0, %s124
    %s128 = sphi 0, %s127
    %s144 = sphi 0, %s128
  $region4: #{gpt_forward.12} parent=0 // loop_header_branch
    %12 = sbr.rel (%p10) target = $region8
  $region5: #{gpt_forward.12} parent=0 // loop_body
    %s14 = ssub.s32 %s9, 1
    %s15 = ssub.s32 %s9, 2
    %s25 = sadd.s32 1, %s18
    %p26 = scmp.ge.s32.totalorder %s25, 1
    %s27 = scalar_select %p26, 0, %s25
    %s28 = sadd.s32 1, %s17
    %s29 = scalar_select %p26, %s28, %s17
    %p30 = scmp.ge.s32.totalorder %s29, 1
    %s31 = scalar_select %p30, 0, %s29
    %s32 = sadd.s32 1, %s16
    %s33 = scalar_select %p30, %s32, %s16
    %p34 = scmp.ge.s32.totalorder %s33, 2
    %s35 = scalar_select %p34, 0, %s33
    %s36 = ssub.s32 %s16, %s35
    %s37 = ssub.s32 %s17, %s31
    %s38 = sor.u32 %s36, %s37
    %p39 = scmp.eq.s32.totalorder %s38, 0
    %s41 = sadd.s32 %s40, 1
    %s42 = scalar_select %p39, %s40, %s41
    %p45 = pneg %p39
    %p46 = scmp.eq.s32.totalorder %s9, 1
    %p47 = por %p45, %p46
    %p48 = scmp.ne.s32.totalorder %s40, %s43
    %p49 = scmp.eq.s32.totalorder %s9, 0
    %p50 = por %p48, %p49
    %p51 = scmp.ne.s32.totalorder %s40, %s43
    %p52 = scmp.eq.s32.totalorder %s14, 1
    %p53 = por %p51, %p52
    %p54 = scmp.ne.s32.totalorder %s43, %s44
    %p55 = scmp.eq.s32.totalorder %s14, 0
    %p56 = por %p54, %p55
    %p57 = scmp.ne.s32.totalorder %s43, %s44
    %p58 = scmp.eq.s32.totalorder %s15, 1
    %p59 = por %p57, %p58
    %p61 = scmp.ne.s32.totalorder %s44, %s60
    %p62 = scmp.eq.s32.totalorder %s15, 0
    %p63 = por %p61, %p62
    %s64 = ssub.s32 %s16, %s35
    %s65 = ssub.s32 %s18, %s27
    %s66 = sor.u32 %s64, %s65
    %p67 = scmp.eq.s32.totalorder %s66, 0
    %s69 = sadd.s32 %s68, 1
    %s70 = scalar_select %p67, %s68, %s69
    %p73 = pneg %p67
    %p74 = scmp.eq.s32.totalorder %s9, 1
    %p75 = por %p73, %p74
    %p76 = scmp.ne.s32.totalorder %s68, %s71
    %p77 = scmp.eq.s32.totalorder %s9, 0
    %p78 = por %p76, %p77
    %p79 = scmp.ne.s32.totalorder %s68, %s71
    %p80 = scmp.eq.s32.totalorder %s14, 1
    %p81 = por %p79, %p80
    %p82 = scmp.ne.s32.totalorder %s71, %s72
    %p83 = scmp.eq.s32.totalorder %s14, 0
    %p84 = por %p82, %p83
    %p85 = scmp.ne.s32.totalorder %s71, %s72
    %p86 = scmp.eq.s32.totalorder %s15, 1
    %p87 = por %p85, %p86
    %p89 = scmp.ne.s32.totalorder %s72, %s88
    %p90 = scmp.eq.s32.totalorder %s15, 0
    %p91 = por %p89, %p90
    %s92 = ssub.s32 %s16, %s35
    %s93 = ssub.s32 %s18, %s27
    %s94 = sor.u32 %s92, %s93
    %p95 = scmp.eq.s32.totalorder %s94, 0
    %s97 = sadd.s32 %s96, 1
    %s98 = scalar_select %p95, %s96, %s97
    %p101 = pneg %p95
    %p102 = scmp.eq.s32.totalorder %s9, 1
    %p103 = por %p101, %p102
    %p104 = scmp.ne.s32.totalorder %s96, %s99
    %p105 = scmp.eq.s32.totalorder %s9, 0
    %p106 = por %p104, %p105
    %p107 = scmp.ne.s32.totalorder %s96, %s99
    %p108 = scmp.eq.s32.totalorder %s14, 1
    %p109 = por %p107, %p108
    %p110 = scmp.ne.s32.totalorder %s99, %s100
    %p111 = scmp.eq.s32.totalorder %s14, 0
    %p112 = por %p110, %p111
    %p113 = scmp.ne.s32.totalorder %s99, %s100
    %p114 = scmp.eq.s32.totalorder %s15, 1
    %p115 = por %p113, %p114
    %p117 = scmp.ne.s32.totalorder %s100, %s116
    %p118 = scmp.eq.s32.totalorder %s15, 0
    %p119 = por %p117, %p118
    %s120 = ssub.s32 %s16, %s35
    %s121 = ssub.s32 %s17, %s31
    %s122 = sor.u32 %s120, %s121
    %p123 = scmp.eq.s32.totalorder %s122, 0
    %s125 = sadd.s32 %s124, 1
    %s126 = scalar_select %p123, %s124, %s125
    %p129 = pneg %p123
    %p130 = scmp.eq.s32.totalorder %s9, 1
    %p131 = por %p129, %p130
    %p132 = scmp.ne.s32.totalorder %s124, %s127
    %p133 = scmp.eq.s32.totalorder %s9, 0
    %p134 = por %p132, %p133
    %p135 = scmp.ne.s32.totalorder %s124, %s127
    %p136 = scmp.eq.s32.totalorder %s14, 1
    %p137 = por %p135, %p136
    %p138 = scmp.ne.s32.totalorder %s127, %s128
    %p139 = scmp.eq.s32.totalorder %s14, 0
    %p140 = por %p138, %p139
    %p141 = scmp.ne.s32.totalorder %s127, %s128
    %p142 = scmp.eq.s32.totalorder %s15, 1
    %p143 = por %p141, %p142
    %p145 = scmp.ne.s32.totalorder %s128, %s144
    %p146 = scmp.eq.s32.totalorder %s15, 0
    %p147 = por %p145, %p146
    %p148 = scmp.le.s32.totalorder 1, %s9
    %p149 = scmp.lt.s32.totalorder %s9, 3
    %p150 = pnand %p148, %p149
    %p151 = pneg %p150
    // Predicated region
    $region9: #{gpt_forward.12} parent=5 // pred_check
      _
    $region10: #{gpt_forward.12} parent=5 // pred_check_branch
      %153 = sbr.rel (%p150) target = $region12
    $region11: #{gpt_forward.12} parent=5 // pred_region
      %s154 = ssub.s32 %s9, 1
    $region12: #{gpt_forward.12} parent=5 // pred_fallthru
      _
    %p155 = scmp.lt.s32.totalorder %s9, 2
    // Predicated region
    $region13: #{gpt_forward.12} parent=5 // pred_check
      %p156 = pneg %p155
    $region14: #{gpt_forward.12} parent=5 // pred_check_branch
      %158 = sbr.rel (%p156) target = $region16
    $region15: #{gpt_forward.12} parent=5 // pred_region
      // Predicated region
      $region17: #{gpt_forward.12} parent=15 // pred_check
        %p159 = pneg %p50
      $region18: #{gpt_forward.12} parent=15 // pred_check_branch
        %161 = sbr.rel (%p159) target = $region20
      $region19: #{gpt_forward.12} parent=15 // pred_region
        %p162 = scmp.lt.s32.totalorder %s16, 1
        %s163 = scalar_select %p162, %s16, 1
        %p164 = scmp.lt.s32.totalorder %s17, 0
        %s165 = scalar_select %p164, %s17, 0
        %s166 = smul.addr %s163, 2
        %s167 = sadd.s32 %s165, %s166
        %s168 = smul.addr %s167, 4
        %s169 = scalar_lea.vmem %s0, %s168
      $region20: #{gpt_forward.12} parent=15 // pred_fallthru
        _
      // Predicated region
      $region21: #{gpt_forward.12} parent=15 // pred_check
        %p170 = pneg %p78
      $region22: #{gpt_forward.12} parent=15 // pred_check_branch
        %172 = sbr.rel (%p170) target = $region24
      $region23: #{gpt_forward.12} parent=15 // pred_region
        %p173 = scmp.lt.s32.totalorder %s16, 1
        %s174 = scalar_select %p173, %s16, 1
        %p175 = scmp.lt.s32.totalorder %s18, 0
        %s176 = scalar_select %p175, %s18, 0
        %s177 = smul.addr %s174, 2
        %s178 = sadd.s32 %s176, %s177
        %s179 = smul.addr %s178, 4
        %s180 = scalar_lea.vmem %s1, %s179
      $region24: #{gpt_forward.12} parent=15 // pred_fallthru
        _
      // Predicated region
      $region25: #{gpt_forward.12} parent=15 // pred_check
        %p181 = pneg %p106
      $region26: #{gpt_forward.12} parent=15 // pred_check_branch
        %183 = sbr.rel (%p181) target = $region28
      $region27: #{gpt_forward.12} parent=15 // pred_region
        %p184 = scmp.lt.s32.totalorder %s16, 1
        %s185 = scalar_select %p184, %s16, 1
        %p186 = scmp.lt.s32.totalorder %s18, 0
        %s187 = scalar_select %p186, %s18, 0
        %s188 = smul.addr %s185, 2
        %s189 = sadd.s32 %s187, %s188
        %s190 = smul.addr %s189, 4
        %s191 = scalar_lea.vmem %s2, %s190
      $region28: #{gpt_forward.12} parent=15 // pred_fallthru
        _
    $region16: #{gpt_forward.12} parent=5 // pred_fallthru
      _
    %p192 = scmp.le.s32.totalorder 1, %s9
    %p193 = scmp.lt.s32.totalorder %s9, 3
    %p194 = pnand %p192, %p193
    %p195 = pneg %p194
    // Predicated region
    $region29: #{gpt_forward.12} parent=5 // pred_check
      _
    $region30: #{gpt_forward.12} parent=5 // pred_check_branch
      %197 = sbr.rel (%p194) target = $region32
    $region31: #{gpt_forward.12} parent=5 // pred_region
      %s198 = ssub.s32 %s9, 1
      %p199 = scmp.lt.s32.totalorder %s19, 1
      %s200 = scalar_select %p199, %s19, 1
      %p201 = scmp.lt.s32.totalorder %s20, 0
      %s202 = scalar_select %p201, %s20, 0
      %s203 = smul.addr %s200, 2
      %s204 = sadd.s32 %s202, %s203
      %s205 = smul.addr %s204, 4
      %s206 = scalar_lea.vmem %s0, %s205
      %p207 = pneg %p56
      %p208 = pneg %p53
      %p209 = scmp.lt.s32.totalorder %s19, 1
      %s210 = scalar_select %p209, %s19, 1
      %p211 = scmp.lt.s32.totalorder %s21, 0
      %s212 = scalar_select %p211, %s21, 0
      %s213 = smul.addr %s210, 2
      %s214 = sadd.s32 %s212, %s213
      %s215 = smul.addr %s214, 4
      %s216 = scalar_lea.vmem %s1, %s215
      %p217 = pneg %p84
      %p218 = pneg %p81
      %p219 = scmp.lt.s32.totalorder %s19, 1
      %s220 = scalar_select %p219, %s19, 1
      %p221 = scmp.lt.s32.totalorder %s21, 0
      %s222 = scalar_select %p221, %s21, 0
      %s223 = smul.addr %s220, 2
      %s224 = sadd.s32 %s222, %s223
      %s225 = smul.addr %s224, 4
      %s226 = scalar_lea.vmem %s2, %s225
      %p227 = pneg %p112
      %p228 = pneg %p109
      %p229 = pneg %p140
      %p230 = pneg %p137
      %p231 = scmp.lt.s32.totalorder %s19, 1
      %s232 = scalar_select %p231, %s19, 1
      %p233 = scmp.lt.s32.totalorder %s20, 0
      %s234 = scalar_select %p233, %s20, 0
      %s235 = smul.addr %s232, 2
      %s236 = sadd.s32 %s234, %s235
      %s237 = smul.addr %s236, 8
      %s238 = scalar_lea.vmem %s3, %s237
      %p239 = scmp.lt.s32.totalorder %s19, 1
      %s240 = scalar_select %p239, %s19, 1
      %p241 = scmp.lt.s32.totalorder %s20, 0
      %s242 = scalar_select %p241, %s20, 0
      %s243 = smul.addr %s240, 2
      %s244 = sadd.s32 %s242, %s243
      %s245 = smul.addr %s244, 4
      %s246 = scalar_lea.vmem %s0, %s245
      %p247 = scmp.lt.s32.totalorder %s19, 1
      %s248 = scalar_select %p247, %s19, 1
      %p249 = scmp.lt.s32.totalorder %s21, 0
      %s250 = scalar_select %p249, %s21, 0
      %s251 = smul.addr %s248, 2
      %s252 = sadd.s32 %s250, %s251
      %s253 = smul.addr %s252, 4
      %s254 = scalar_lea.vmem %s1, %s253
      %p255 = scmp.lt.s32.totalorder %s19, 1
      %s256 = scalar_select %p255, %s19, 1
      %p257 = scmp.lt.s32.totalorder %s21, 0
      %s258 = scalar_select %p257, %s21, 0
      %s259 = smul.addr %s256, 2
      %s260 = sadd.s32 %s258, %s259
      %s261 = smul.addr %s260, 4
      %s262 = scalar_lea.vmem %s2, %s261
      %p263 = scmp.lt.s32.totalorder %s19, 1
      %s264 = scalar_select %p263, %s19, 1
      %p265 = scmp.lt.s32.totalorder %s20, 0
      %s266 = scalar_select %p265, %s20, 0
      %s267 = smul.addr %s264, 2
      %s268 = sadd.s32 %s266, %s267
      %s269 = smul.addr %s268, 8
      %s270 = scalar_lea.vmem %s3, %s269
      %s272 = smul.u32 %s20, 8
      %s273 = smul.u32 %s21, 8
      %p274 = scmp.eq.s32.totalorder %s21, 0
      // Predicated region
      $region33: #{gpt_forward.12} parent=31 // pred_check
        %p275 = pneg %p274
      $region34: #{gpt_forward.12} parent=31 // pred_check_branch
        %277 = sbr.rel (%p275) target = $region36
      $region35: #{gpt_forward.12} parent=31 // pred_region
        %vm278 = vcmask 7168
        %279 = vst.msk [vmem:[#allocation2] sm:$0xff] %vm278, -1e+30
        %280 = vst.msk [vmem:[#allocation2 + $0x8] sm:$0xff] %vm278, -1e+30
        %281 = vst.msk [vmem:[#allocation3] sm:$0xff] %vm278, 0.0
        %282 = vst.msk [vmem:[#allocation3 + $0x8] sm:$0xff] %vm278, 0.0
        %vm283 = vcmask 130048
        %284 = vst.msk [vmem:[#allocation4] sm:$0xff] %vm283, 0.0
        %285 = vst.msk [vmem:[#allocation4 + $0x8] sm:$0xff] %vm283, 0.0
      $region36: #{gpt_forward.12} parent=31 // pred_fallthru
        _
      %s286 = sadd.s32 %s272, 7
      %p287 = scmp.le.s32.totalorder %s273, %s286
      // Predicated region
      $region37: #{gpt_forward.12} parent=31 // pred_check
        %p288 = pneg %p287
      $region38: #{gpt_forward.12} parent=31 // pred_check_branch
        %290 = sbr.rel (%p288) target = $region40
      $region39: #{gpt_forward.12} parent=31 // pred_region
        %v291 = vld [vmem:[%s246] sm:$0xf]
        %v292 = vld [vmem:[%s246 + $0x4] sm:$0xf]
        %v293 = vld [vmem:[%s254] sm:$0xf]
        %v294 = vld [vmem:[%s254 + $0x4] sm:$0xf]
        %v295 = vld [vmem:[%s262] sm:$0xf]
        %v296 = vld [vmem:[%s262 + $0x4] sm:$0xf]
        %vm297 = vcmask 130048
        %v299 = vsel %vm297, %v291, 0
        %v302 = vsel %vm297, %v293, 0
        %304 = vmatprep.subr.bf16.mxu0 0
        %305 = vmatpush1.bf16.xpose.msra.mxu0 %v302
        %306 = vmatprep.subr.bf16.mxu0 0
        %307 = vmatpush1.bf16.xpose.msra.mxu0 0
        %308 = vmatprep.subr.bf16.mxu0 0
        %309 = vmatpush1.bf16.xpose.msra.mxu0 0
        %310 = vmatprep.subr.bf16.mxu0 0
        %311 = vmatpush1.bf16.xpose.msra.mxu0 0
        %312 = vmatprep.subr.bf16.mxu0 0
        %313 = vmatpush1.bf16.xpose.msra.mxu0 0
        %314 = vmatprep.subr.bf16.mxu0 0
        %315 = vmatpush1.bf16.xpose.msra.mxu0 0
        %316 = vmatprep.subr.bf16.mxu0 0
        %317 = vmatpush1.bf16.xpose.msra.mxu0 0
        %318 = vmatprep.subr.bf16.mxu0 0
        %319 = vmatpush1.bf16.xpose.msra.mxu0 0
        %320 = vmatprep.subr.bf16.mxu0 0
        %321 = vmatpush1.bf16.xpose.msra.mxu0 0
        %322 = vmatprep.subr.bf16.mxu0 0
        %323 = vmatpush1.bf16.xpose.msra.mxu0 0
        %324 = vmatprep.subr.bf16.mxu0 0
        %325 = vmatpush1.bf16.xpose.msra.mxu0 0
        %326 = vmatprep.subr.bf16.mxu0 0
        %327 = vmatpush1.bf16.xpose.msra.mxu0 0
        %328 = vmatprep.subr.bf16.mxu0 0
        %329 = vmatpush1.bf16.xpose.msra.mxu0 0
        %330 = vmatprep.subr.bf16.mxu0 0
        %331 = vmatpush1.bf16.xpose.msra.mxu0 0
        %332 = vmatprep.subr.bf16.mxu0 0
        %333 = vmatpush1.bf16.xpose.msra.mxu0 0
        %334 = vmatprep.subr.bf16.mxu0 0
        %335 = vmatpush1.bf16.xpose.msra.mxu0 0
        %336 = vmatprep.mubr.bf16.mxu0 0
        %337 = vmatmul.mubr.bf16.gmra.mrb[0].mxu0 %v299
        %v338 = vpop.f32.mrb[0].mxu0
        %v339 = vadd.f32 0.0, %v338
        %v340 = vpop.f32.mrb[0].mxu0
        %v341 = vpop.f32.mrb[0].mxu0
        %v342 = vpop.f32.mrb[0].mxu0
        %343 = vdwg.mxu0
        %v345 = vsel %vm297, %v292, 0
        %v348 = vsel %vm297, %v294, 0
        %350 = vmatprep.subr.bf16.mxu0 0
        %351 = vmatpush1.bf16.xpose.msra.mxu0 %v348
        %352 = vmatprep.subr.bf16.mxu0 0
        %353 = vmatpush1.bf16.xpose.msra.mxu0 0
        %354 = vmatprep.subr.bf16.mxu0 0
        %355 = vmatpush1.bf16.xpose.msra.mxu0 0
        %356 = vmatprep.subr.bf16.mxu0 0
        %357 = vmatpush1.bf16.xpose.msra.mxu0 0
        %358 = vmatprep.subr.bf16.mxu0 0
        %359 = vmatpush1.bf16.xpose.msra.mxu0 0
        %360 = vmatprep.subr.bf16.mxu0 0
        %361 = vmatpush1.bf16.xpose.msra.mxu0 0
        %362 = vmatprep.subr.bf16.mxu0 0
        %363 = vmatpush1.bf16.xpose.msra.mxu0 0
        %364 = vmatprep.subr.bf16.mxu0 0
        %365 = vmatpush1.bf16.xpose.msra.mxu0 0
        %366 = vmatprep.subr.bf16.mxu0 0
        %367 = vmatpush1.bf16.xpose.msra.mxu0 0
        %368 = vmatprep.subr.bf16.mxu0 0
        %369 = vmatpush1.bf16.xpose.msra.mxu0 0
        %370 = vmatprep.subr.bf16.mxu0 0
        %371 = vmatpush1.bf16.xpose.msra.mxu0 0
        %372 = vmatprep.subr.bf16.mxu0 0
        %373 = vmatpush1.bf16.xpose.msra.mxu0 0
        %374 = vmatprep.subr.bf16.mxu0 0
        %375 = vmatpush1.bf16.xpose.msra.mxu0 0
        %376 = vmatprep.subr.bf16.mxu0 0
        %377 = vmatpush1.bf16.xpose.msra.mxu0 0
        %378 = vmatprep.subr.bf16.mxu0 0
        %379 = vmatpush1.bf16.xpose.msra.mxu0 0
        %380 = vmatprep.subr.bf16.mxu0 0
        %381 = vmatpush1.bf16.xpose.msra.mxu0 0
        %382 = vmatprep.mubr.bf16.mxu0 0
        %383 = vmatmul.mubr.bf16.gmra.mrb[0].mxu0 %v345
        %v384 = vpop.f32.mrb[0].mxu0
        %v385 = vadd.f32 0.0, %v384
        %v386 = vpop.f32.mrb[0].mxu0
        %v387 = vpop.f32.mrb[0].mxu0
        %v388 = vpop.f32.mrb[0].mxu0
        %389 = vdwg.mxu0
        %v390 = vmul.f32 %v339, 0.25
        %v391 = vmul.f32 %v385, 0.25
        %v392 = vlaneseq
        %v393 = vshrl.u32 %v392, 7
        %v394 = vstv %s272
        %v395 = vadd.s32 %v394, %v393
        %v396 = vlaneseq
        %v397 = vand.u32 %v396, 127
        %v398 = vstv %s273
        %v399 = vadd.s32 %v398, %v397
        %vm400 = vcmp.ge.s32.totalorder %v395, %v399
        %v401 = vsel %vm400, 1, 0
        %vm402 = vcmp.eq.s32.totalorder %v401, 1
        %v403 = vsel %vm402, %v390, -1e+30
        %v404 = vsel %vm402, %v391, -1e+30
        %v405 = vld [vmem:[#allocation2] sm:$0xff]
        %v406 = vld [vmem:[#allocation2 + $0x8] sm:$0xff]
        %vm407 = vcmask 64512
        %v408 = vsel %vm407, %v403, -inf
        %409 = vmax.xlane.f32.xlu0 %v408
        %v410 = vpop.xlane.xlu0 %409
        %v411 = vsel %vm407, %v404, -inf
        %412 = vmax.xlane.f32.xlu0 %v411
        %v413 = vpop.xlane.xlu0 %412
        %v414 = vmax.f32 %v405, %v410
        %v415 = vmax.f32 %v406, %v413
        %v416 = vsub.f32 %v405, %v414
        %v417 = vsub.f32 %v406, %v415
        %v418 = vmul.f32 %v416, 1.442695
        %v419 = vpow.pop %v418
        %v420 = vmul.f32 %v417, 1.442695
        %v421 = vpow.pop %v420
        %423 = vset.pattern.permute.xlu0 0
        %424 = vperm.xlu0 %423, %v414
        %v425 = vpop.permute.xlu0 %424
        %428 = vset.pattern.permute.xlu0 0
        %429 = vperm.xlu0 %428, %v415
        %v430 = vpop.permute.xlu0 %429
        %v432 = vsub.f32 %v403, %v425
        %v433 = vsub.f32 %v404, %v430
        %v434 = vmul.f32 %v432, 1.442695
        %v435 = vpow.pop %v434
        %v436 = vmul.f32 %v433, 1.442695
        %v437 = vpow.pop %v436
        %v438 = vld [vmem:[#allocation3] sm:$0xff]
        %v439 = vld [vmem:[#allocation3 + $0x8] sm:$0xff]
        %v440 = vmul.f32 %v419, %v438
        %v441 = vmul.f32 %v421, %v439
        %v442 = vsel %vm407, %v435, 0.0
        %443 = vadd.xlane.f32.xlu0 %v442
        %v444 = vpop.xlane.xlu0 %443
        %v445 = vsel %vm407, %v437, 0.0
        %446 = vadd.xlane.f32.xlu0 %v445
        %v447 = vpop.xlane.xlu0 %446
        %v448 = vadd.f32 %v440, %v444
        %v449 = vadd.f32 %v441, %v447
        %vm450 = vcmask 7168
        %451 = vst.msk [vmem:[#allocation3] sm:$0xff] %vm450, %v448
        %452 = vst.msk [vmem:[#allocation3 + $0x8] sm:$0xff] %vm450, %v449
        %v453 = vld [vmem:[#allocation4] sm:$0xff]
        %v454 = vld [vmem:[#allocation4 + $0x8] sm:$0xff]
        %456 = vset.pattern.permute.xlu0 0
        %457 = vperm.xlu0 %456, %v419
        %v458 = vpop.permute.xlu0 %457
        %461 = vset.pattern.permute.xlu0 0
        %462 = vperm.xlu0 %461, %v421
        %v463 = vpop.permute.xlu0 %462
        %v465 = vmul.f32 %v458, %v453
        %v466 = vmul.f32 %v463, %v454
        %v467 = vpack.c.bf16 %v435, %v435
        %v468 = vpack.c.bf16 %v437, %v437
        %v470 = vsel %vm407, %v467, 0
        %vm472 = vcmask 1043456
        %v474 = vsel %vm472, %v295, 0
        %476 = vmatprep.subr.bf16.mxu0 0
        %477 = vmatpush1.bf16.msra.mxu0 %v474
        %478 = vmatprep.subr.bf16.mxu0 0
        %479 = vmatpush1.bf16.msra.mxu0 0
        %480 = vmatprep.subr.bf16.mxu0 0
        %481 = vmatpush1.bf16.msra.mxu0 0
        %482 = vmatprep.subr.bf16.mxu0 0
        %483 = vmatpush1.bf16.msra.mxu0 0
        %484 = vmatprep.subr.bf16.mxu0 0
        %485 = vmatpush1.bf16.msra.mxu0 0
        %486 = vmatprep.subr.bf16.mxu0 0
        %487 = vmatpush1.bf16.msra.mxu0 0
        %488 = vmatprep.subr.bf16.mxu0 0
        %489 = vmatpush1.bf16.msra.mxu0 0
        %490 = vmatprep.subr.bf16.mxu0 0
        %491 = vmatpush1.bf16.msra.mxu0 0
        %492 = vmatprep.subr.bf16.mxu0 0
        %493 = vmatpush1.bf16.msra.mxu0 0
        %494 = vmatprep.subr.bf16.mxu0 0
        %495 = vmatpush1.bf16.msra.mxu0 0
        %496 = vmatprep.subr.bf16.mxu0 0
        %497 = vmatpush1.bf16.msra.mxu0 0
        %498 = vmatprep.subr.bf16.mxu0 0
        %499 = vmatpush1.bf16.msra.mxu0 0
        %500 = vmatprep.subr.bf16.mxu0 0
        %501 = vmatpush1.bf16.msra.mxu0 0
        %502 = vmatprep.subr.bf16.mxu0 0
        %503 = vmatpush1.bf16.msra.mxu0 0
        %504 = vmatprep.subr.bf16.mxu0 0
        %505 = vmatpush1.bf16.msra.mxu0 0
        %506 = vmatprep.subr.bf16.mxu0 0
        %507 = vmatpush1.bf16.msra.mxu0 0
        %508 = vmatprep.mubr.bf16.mxu0 0
        %509 = vmatmul.mubr.bf16.gmra.mrb[0].mxu0 %v470
        %v510 = vpop.f32.mrb[0].mxu0
        %v511 = vadd.f32 0.0, %v510
        %v512 = vpop.f32.mrb[0].mxu0
        %v513 = vpop.f32.mrb[0].mxu0
        %v514 = vpop.f32.mrb[0].mxu0
        %515 = vdwg.mxu0
        %v517 = vsel %vm407, %v468, 0
        %v520 = vsel %vm472, %v296, 0
        %522 = vmatprep.subr.bf16.mxu0 0
        %523 = vmatpush1.bf16.msra.mxu0 %v520
        %524 = vmatprep.subr.bf16.mxu0 0
        %525 = vmatpush1.bf16.msra.mxu0 0
        %526 = vmatprep.subr.bf16.mxu0 0
        %527 = vmatpush1.bf16.msra.mxu0 0
        %528 = vmatprep.subr.bf16.mxu0 0
        %529 = vmatpush1.bf16.msra.mxu0 0
        %530 = vmatprep.subr.bf16.mxu0 0
        %531 = vmatpush1.bf16.msra.mxu0 0
        %532 = vmatprep.subr.bf16.mxu0 0
        %533 = vmatpush1.bf16.msra.mxu0 0
        %534 = vmatprep.subr.bf16.mxu0 0
        %535 = vmatpush1.bf16.msra.mxu0 0
        %536 = vmatprep.subr.bf16.mxu0 0
        %537 = vmatpush1.bf16.msra.mxu0 0
        %538 = vmatprep.subr.bf16.mxu0 0
        %539 = vmatpush1.bf16.msra.mxu0 0
        %540 = vmatprep.subr.bf16.mxu0 0
        %541 = vmatpush1.bf16.msra.mxu0 0
        %542 = vmatprep.subr.bf16.mxu0 0
        %543 = vmatpush1.bf16.msra.mxu0 0
        %544 = vmatprep.subr.bf16.mxu0 0
        %545 = vmatpush1.bf16.msra.mxu0 0
        %546 = vmatprep.subr.bf16.mxu0 0
        %547 = vmatpush1.bf16.msra.mxu0 0
        %548 = vmatprep.subr.bf16.mxu0 0
        %549 = vmatpush1.bf16.msra.mxu0 0
        %550 = vmatprep.subr.bf16.mxu0 0
        %551 = vmatpush1.bf16.msra.mxu0 0
        %552 = vmatprep.subr.bf16.mxu0 0
        %553 = vmatpush1.bf16.msra.mxu0 0
        %554 = vmatprep.mubr.bf16.mxu0 0
        %555 = vmatmul.mubr.bf16.gmra.mrb[0].mxu0 %v517
        %v556 = vpop.f32.mrb[0].mxu0
        %v557 = vadd.f32 0.0, %v556
        %v558 = vpop.f32.mrb[0].mxu0
        %v559 = vpop.f32.mrb[0].mxu0
        %v560 = vpop.f32.mrb[0].mxu0
        %561 = vdwg.mxu0
        %v562 = vadd.f32 %v465, %v511
        %v563 = vadd.f32 %v466, %v557
        %564 = vst.msk [vmem:[#allocation4] sm:$0xff] %vm297, %v562
        %565 = vst.msk [vmem:[#allocation4 + $0x8] sm:$0xff] %vm297, %v563
        %566 = vst.msk [vmem:[#allocation2] sm:$0xff] %vm450, %v414
        %567 = vst.msk [vmem:[#allocation2 + $0x8] sm:$0xff] %vm450, %v415
      $region40: #{gpt_forward.12} parent=31 // pred_fallthru
        _
      // Predicated region
      $region41: #{gpt_forward.12} parent=31 // pred_check
        %p568 = pneg %p274
      $region42: #{gpt_forward.12} parent=31 // pred_check_branch
        %570 = sbr.rel (%p568) target = $region44
      $region43: #{gpt_forward.12} parent=31 // pred_region
        %v571 = vld [vmem:[#allocation4] sm:$0xff]
        %v572 = vld [vmem:[#allocation4 + $0x8] sm:$0xff]
        %v573 = vld [vmem:[#allocation3] sm:$0xff]
        %v574 = vld [vmem:[#allocation3 + $0x8] sm:$0xff]
        %v575 = vrcp.pop %v573
        %v576 = vrcp.pop %v574
        %578 = vset.pattern.permute.xlu0 0
        %579 = vperm.xlu0 %578, %v575
        %v580 = vpop.permute.xlu0 %579
        %583 = vset.pattern.permute.xlu0 0
        %584 = vperm.xlu0 %583, %v576
        %v585 = vpop.permute.xlu0 %584
        %v587 = vmul.f32 %v571, %v580
        %v588 = vmul.f32 %v572, %v585
        %vm589 = vcmask 130048
        %590 = vst.msk [vmem:[%s270] sm:$0xff] %vm589, %v587
        %591 = vst.msk [vmem:[%s270 + $0x8] sm:$0xff] %vm589, %v588
      $region44: #{gpt_forward.12} parent=31 // pred_fallthru
        _
      %p592 = scmp.lt.s32.totalorder %s19, 1
      %s593 = scalar_select %p592, %s19, 1
      %p594 = scmp.lt.s32.totalorder %s20, 0
      %s595 = scalar_select %p594, %s20, 0
      %s596 = smul.addr %s593, 2
      %s597 = sadd.s32 %s595, %s596
      %s598 = smul.addr %s597, 8
      %s599 = scalar_lea.vmem %s3, %s598
      // Predicated region
      $region45: #{gpt_forward.12} parent=31 // pred_check
        %p600 = pneg %p137
      $region46: #{gpt_forward.12} parent=31 // pred_check_branch
        %602 = sbr.rel (%p600) target = $region48
      $region47: #{gpt_forward.12} parent=31 // pred_region
        _
      $region48: #{gpt_forward.12} parent=31 // pred_fallthru
        _
    $region32: #{gpt_forward.12} parent=5 // pred_fallthru
      _
    %p603 = scmp.le.s32.totalorder 2, %s9
    // Predicated region
    $region49: #{gpt_forward.12} parent=5 // pred_check
      %p604 = pneg %p603
    $region50: #{gpt_forward.12} parent=5 // pred_check_branch
      %606 = sbr.rel (%p604) target = $region52
    $region51: #{gpt_forward.12} parent=5 // pred_region
      %s607 = ssub.s32 %s9, 2
      // Predicated region
      $region53: #{gpt_forward.12} parent=51 // pred_check
        %p608 = pneg %p143
      $region54: #{gpt_forward.12} parent=51 // pred_check_branch
        %610 = sbr.rel (%p608) target = $region56
      $region55: #{gpt_forward.12} parent=51 // pred_region
        %p611 = scmp.lt.s32.totalorder %s22, 1
        %s612 = scalar_select %p611, %s22, 1
        %p613 = scmp.lt.s32.totalorder %s23, 0
        %s614 = scalar_select %p613, %s23, 0
        %s615 = smul.addr %s612, 2
        %s616 = sadd.s32 %s614, %s615
        %s617 = smul.addr %s616, 8
        %s618 = scalar_lea.vmem %s3, %s617
      $region56: #{gpt_forward.12} parent=51 // pred_fallthru
        _
    $region52: #{gpt_forward.12} parent=5 // pred_fallthru
      _
  $region6: #{gpt_forward.12} parent=0 // loop_footer
    %s13 = sadd.s32 1, %s9
  $region7: #{gpt_forward.12} parent=0 // loop_footer_branch
    %8 = sbr.rel target = $region3
  $region8: #{gpt_forward.12} parent=0 // loop_exit
    _

// kernel: gpt_forward.14
$region0: #{gpt_forward.14}
  #allocation0 [shape = 'u32[]', space=smem, size = 0x4, offset = 0x4, fixed_abs, tag = 'smem constant byte address 0x4 - core index']
  #allocation1 [shape = 'u32[144,128]{1,0:T(1,128)}', space=vmem, size = 0x12000, scoped, tag = 'internal scratch']
  %s0 = inlined_call_operand.vmem [shape: f32[16,32], index: 0, kind: input, shape index: {}]
  %s1 = inlined_call_operand.vmem [shape: f32[1,32], index: 1, kind: input, shape index: {}]
  %s2 = inlined_call_operand.vmem [shape: f32[1,32], index: 2, kind: input, shape index: {}]
  %s3 = inlined_call_operand.vmem [shape: bf16[32,128], index: 3, kind: input, shape index: {}]
  %s4 = inlined_call_operand.vmem [shape: f32[1,128], index: 4, kind: input, shape index: {}]
  %s5 = inlined_call_operand.vmem [shape: f32[16,128], index: 5, kind: output, shape index: {}]
  %s6 = sld [smem:[#allocation0]]
  $region30: #{gpt_forward.14} parent=0
    _
  %s8 = ssub.s32 1, %s6
  %s9 = scalar_select 0, %s8, %s6
  // Predicated region
  $region2: #{gpt_forward.14} parent=0 // pred_check
    _
  $region3: #{gpt_forward.14} parent=0 // pred_check_branch
    %11 = sbr.rel (0) target = $region5
  $region4: #{gpt_forward.14} parent=0 // pred_region
    _
  $region5: #{gpt_forward.14} parent=0 // pred_fallthru
    _
  // Predicated region
  $region6: #{gpt_forward.14} parent=0 // pred_check
    _
  $region7: #{gpt_forward.14} parent=0 // pred_check_branch
    %13 = sbr.rel (0) target = $region9
  $region8: #{gpt_forward.14} parent=0 // pred_region
    _
  $region9: #{gpt_forward.14} parent=0 // pred_fallthru
    _
  // Predicated region
  $region10: #{gpt_forward.14} parent=0 // pred_check
    _
  $region11: #{gpt_forward.14} parent=0 // pred_check_branch
    %15 = sbr.rel (0) target = $region13
  $region12: #{gpt_forward.14} parent=0 // pred_region
    _
  $region13: #{gpt_forward.14} parent=0 // pred_fallthru
    _
  // Predicated region
  $region14: #{gpt_forward.14} parent=0 // pred_check
    _
  $region15: #{gpt_forward.14} parent=0 // pred_check_branch
    %17 = sbr.rel (0) target = $region17
  $region16: #{gpt_forward.14} parent=0 // pred_region
    _
  $region17: #{gpt_forward.14} parent=0 // pred_fallthru
    _
  // Predicated region
  $region18: #{gpt_forward.14} parent=0 // pred_check
    _
  $region19: #{gpt_forward.14} parent=0 // pred_check_branch
    %19 = sbr.rel (0) target = $region21
  $region20: #{gpt_forward.14} parent=0 // pred_region
    _
  $region21: #{gpt_forward.14} parent=0 // pred_fallthru
    _
  %v21 = vld [vmem:[%s0] sm:$0xff]
  %v22 = vld [vmem:[%s0 + $0x8] sm:$0xff]
  %v23 = vld [vmem:[%s1] sm:$0x1]
  %v24 = vld [vmem:[%s2] sm:$0x1]
  %vm25 = vcmask 261120
  %v26 = vsel %vm25, %v21, 0.0
  %27 = vadd.xlane.f32.xlu0 %v26
  %v28 = vpop.xlane.xlu0 %27
  %v29 = vsel %vm25, %v22, 0.0
  %30 = vadd.xlane.f32.xlu0 %v29
  %v31 = vpop.xlane.xlu0 %30
  %v32 = vrcp.pop 32.0
  %v33 = vmul.f32 %v28, %v32
  %v34 = vmul.f32 %v31, %v32
  %v35 = vsub.f32 %v21, %v33
  %v36 = vsub.f32 %v22, %v34
  %v37 = vmul.f32 %v35, %v35
  %v38 = vmul.f32 %v36, %v36
  %v39 = vsel %vm25, %v37, 0.0
  %40 = vadd.xlane.f32.xlu0 %v39
  %v41 = vpop.xlane.xlu0 %40
  %v42 = vsel %vm25, %v38, 0.0
  %43 = vadd.xlane.f32.xlu0 %v42
  %v44 = vpop.xlane.xlu0 %43
  %v45 = vmul.f32 %v41, %v32
  %v46 = vmul.f32 %v44, %v32
  %v47 = vadd.f32 %v45, 1e-05
  %v48 = vadd.f32 %v46, 1e-05
  %v49 = vrsqrt.pop %v47
  %v50 = vrsqrt.pop %v48
  %v51 = vmul.f32 %v35, %v49
  %v52 = vmul.f32 %v36, %v50
  %v54 = vlaneseq
  %v55 = vshrl.u32 %v54, 7
  %v56 = vsub.s32 0, %v55
  %v57 = vrot.slane %v23, %v56
  %v59 = vmul.f32 %v51, %v57
  %v60 = vmul.f32 %v52, %v57
  %v62 = vlaneseq
  %v63 = vshrl.u32 %v62, 7
  %v64 = vsub.s32 0, %v63
  %v65 = vrot.slane %v24, %v64
  %v67 = vadd.f32 %v59, %v65
  %v68 = vadd.f32 %v60, %v65
  %v69 = vpack.c.bf16 %v68, %v67
  %v70 = vld [vmem:[%s3] sm:$0xf]
  %v71 = vld [vmem:[%s3 + $0x4] sm:$0xf]
  %v72 = vld [vmem:[%s3 + $0x8] sm:$0xf]
  %v73 = vld [vmem:[%s3 + $0xc] sm:$0xf]
  %v74 = vld [vmem:[%s4] sm:$0x1]
  %v76 = vlaneseq
  %v77 = vshrl.u32 %v76, 7
  %v78 = vsub.s32 0, %v77
  %v79 = vrot.slane %v74, %v78
  %v85 = vunpack.c.l.b16 %v70
  %v86 = vunpack.c.l.b16 %v71
  %v87 = vunpack.c.l.b16 %v72
  %v88 = vunpack.c.l.b16 %v73
  %v89 = vpack.c.b16 %v86, %v85
  %v90 = vpack.c.b16 %v88, %v87
  %v94 = vsel %vm25, %v69, 0
  %96 = vmatprep.subr.bf16.mxu0 0
  %97 = vmatpush1.bf16.msra.mxu0 %v89
  %98 = vmatprep.subr.bf16.mxu0 0
  %99 = vmatpush1.bf16.msra.mxu0 %v90
  %100 = vmatprep.subr.bf16.mxu0 0
  %101 = vmatpush1.bf16.msra.mxu0 0
  %102 = vmatprep.subr.bf16.mxu0 0
  %103 = vmatpush1.bf16.msra.mxu0 0
  %104 = vmatprep.subr.bf16.mxu0 0
  %105 = vmatpush1.bf16.msra.mxu0 0
  %106 = vmatprep.subr.bf16.mxu0 0
  %107 = vmatpush1.bf16.msra.mxu0 0
  %108 = vmatprep.subr.bf16.mxu0 0
  %109 = vmatpush1.bf16.msra.mxu0 0
  %110 = vmatprep.subr.bf16.mxu0 0
  %111 = vmatpush1.bf16.msra.mxu0 0
  %112 = vmatprep.subr.bf16.mxu0 0
  %113 = vmatpush1.bf16.msra.mxu0 0
  %114 = vmatprep.subr.bf16.mxu0 0
  %115 = vmatpush1.bf16.msra.mxu0 0
  %116 = vmatprep.subr.bf16.mxu0 0
  %117 = vmatpush1.bf16.msra.mxu0 0
  %118 = vmatprep.subr.bf16.mxu0 0
  %119 = vmatpush1.bf16.msra.mxu0 0
  %120 = vmatprep.subr.bf16.mxu0 0
  %121 = vmatpush1.bf16.msra.mxu0 0
  %122 = vmatprep.subr.bf16.mxu0 0
  %123 = vmatpush1.bf16.msra.mxu0 0
  %124 = vmatprep.subr.bf16.mxu0 0
  %125 = vmatpush1.bf16.msra.mxu0 0
  %126 = vmatprep.subr.bf16.mxu0 0
  %127 = vmatpush1.bf16.msra.mxu0 0
  %128 = vmatprep.mubr.bf16.mxu0 0
  %129 = vmatmul.mubr.bf16.gmra.mrb[0].mxu0 %v94
  %v130 = vpop.f32.mrb[0].mxu0
  %v131 = vadd.f32 %v79, %v130
  %v132 = vpop.f32.mrb[0].mxu0
  %v133 = vpop.f32.mrb[0].mxu0
  %v134 = vadd.f32 %v79, %v133
  %v135 = vpop.f32.mrb[0].mxu0
  %136 = vdwg.mxu0
  %v137 = vmul.f32 %v131, 0.5
  %v138 = vmul.f32 %v134, 0.5
  %v139 = vmul.f32 %v131, 0.044715
  %v140 = vmul.f32 %v134, 0.044715
  %v141 = vmul.f32 %v139, %v131
  %v142 = vmul.f32 %v140, %v134
  %v143 = vmul.f32 %v141, %v131
  %v144 = vmul.f32 %v142, %v134
  %v145 = vadd.f32 %v131, %v143
  %v146 = vadd.f32 %v134, %v144
  %v147 = vmul.f32 %v145, 0.7978846
  %v148 = vmul.f32 %v146, 0.7978846
  %v149 = vtanh.pop %v147
  %v150 = vtanh.pop %v148
  %v151 = vadd.f32 %v149, 1.0
  %v152 = vadd.f32 %v150, 1.0
  %v153 = vmul.f32 %v137, %v151
  %v154 = vmul.f32 %v138, %v152
  %155 = vst [vmem:[%s5] sm:$0xff] %v153
  %156 = vst [vmem:[%s5 + $0x8] sm:$0xff] %v154
  // Predicated region
  $region22: #{gpt_forward.14} parent=0 // pred_check
    _
  $region23: #{gpt_forward.14} parent=0 // pred_check_branch
    %158 = sbr.rel (0) target = $region25
  $region24: #{gpt_forward.14} parent=0 // pred_region
    _
  $region25: #{gpt_forward.14} parent=0 // pred_fallthru
    _
  // Predicated region
  $region26: #{gpt_forward.14} parent=0 // pred_check
    _
  $region27: #{gpt_forward.14} parent=0 // pred_check_branch
    %160 = sbr.rel (0) target = $region29
  $region28: #{gpt_forward.14} parent=0 // pred_region
    _
  $region29: #{gpt_forward.14} parent=0 // pred_fallthru
    _

// kernel: gpt_forward.15
$region0: #{gpt_forward.15}
  #allocation0 [shape = 'u32[]', space=smem, size = 0x4, offset = 0x4, fixed_abs, tag = 'smem constant byte address 0x4 - core index']
  #allocation1 [shape = 'u32[144,128]{1,0:T(1,128)}', space=vmem, size = 0x12000, scoped, tag = 'internal scratch']
  %s0 = inlined_call_operand.vmem [shape: f32[16,128], index: 0, kind: input, shape index: {}]
  %s1 = inlined_call_operand.vmem [shape: bf16[128,32], index: 1, kind: input, shape index: {}]
  %s2 = inlined_call_operand.vmem [shape: f32[1,32], index: 2, kind: input, shape index: {}]
  %s3 = inlined_call_operand.vmem [shape: f32[16,32], index: 3, kind: input, shape index: {}]
  %s4 = inlined_call_operand.vmem [shape: f32[16,32], index: 4, kind: output, shape index: {}]
  %s5 = sld [smem:[#allocation0]]
  $region26: #{gpt_forward.15} parent=0
    _
  %s7 = ssub.s32 1, %s5
  %s8 = scalar_select 0, %s7, %s5
  // Predicated region
  $region2: #{gpt_forward.15} parent=0 // pred_check
    _
  $region3: #{gpt_forward.15} parent=0 // pred_check_branch
    %10 = sbr.rel (0) target = $region5
  $region4: #{gpt_forward.15} parent=0 // pred_region
    _
  $region5: #{gpt_forward.15} parent=0 // pred_fallthru
    _
  // Predicated region
  $region6: #{gpt_forward.15} parent=0 // pred_check
    _
  $region7: #{gpt_forward.15} parent=0 // pred_check_branch
    %12 = sbr.rel (0) target = $region9
  $region8: #{gpt_forward.15} parent=0 // pred_region
    _
  $region9: #{gpt_forward.15} parent=0 // pred_fallthru
    _
  // Predicated region
  $region10: #{gpt_forward.15} parent=0 // pred_check
    _
  $region11: #{gpt_forward.15} parent=0 // pred_check_branch
    %14 = sbr.rel (0) target = $region13
  $region12: #{gpt_forward.15} parent=0 // pred_region
    _
  $region13: #{gpt_forward.15} parent=0 // pred_fallthru
    _
  // Predicated region
  $region14: #{gpt_forward.15} parent=0 // pred_check
    _
  $region15: #{gpt_forward.15} parent=0 // pred_check_branch
    %16 = sbr.rel (0) target = $region17
  $region16: #{gpt_forward.15} parent=0 // pred_region
    _
  $region17: #{gpt_forward.15} parent=0 // pred_fallthru
    _
  %v18 = vld [vmem:[%s0] sm:$0xff]
  %v19 = vld [vmem:[%s0 + $0x8] sm:$0xff]
  %v20 = vpack.c.bf16 %v19, %v18
  %v21 = vld [vmem:[%s1] sm:$0xf]
  %v22 = vld [vmem:[%s1 + $0x4] sm:$0xf]
  %v23 = vld [vmem:[%s1 + $0x8] sm:$0xf]
  %v24 = vld [vmem:[%s1 + $0xc] sm:$0xf]
  %v25 = vld [vmem:[%s1 + $0x10] sm:$0xf]
  %v26 = vld [vmem:[%s1 + $0x14] sm:$0xf]
  %v27 = vld [vmem:[%s1 + $0x18] sm:$0xf]
  %v28 = vld [vmem:[%s1 + $0x1c] sm:$0xf]
  %v29 = vld [vmem:[%s1 + $0x20] sm:$0xf]
  %v30 = vld [vmem:[%s1 + $0x24] sm:$0xf]
  %v31 = vld [vmem:[%s1 + $0x28] sm:$0xf]
  %v32 = vld [vmem:[%s1 + $0x2c] sm:$0xf]
  %v33 = vld [vmem:[%s1 + $0x30] sm:$0xf]
  %v34 = vld [vmem:[%s1 + $0x34] sm:$0xf]
  %v35 = vld [vmem:[%s1 + $0x38] sm:$0xf]
  %v36 = vld [vmem:[%s1 + $0x3c] sm:$0xf]
  %v37 = vld [vmem:[%s2] sm:$0x1]
  %v39 = vlaneseq
  %v40 = vshrl.u32 %v39, 7
  %v41 = vsub.s32 0, %v40
  %v42 = vrot.slane %v37, %v41
  %v60 = vunpack.c.l.b16 %v21
  %v61 = vunpack.c.l.b16 %v22
  %v62 = vunpack.c.l.b16 %v23
  %v63 = vunpack.c.l.b16 %v24
  %v64 = vunpack.c.l.b16 %v25
  %v65 = vunpack.c.l.b16 %v26
  %v66 = vunpack.c.l.b16 %v27
  %v67 = vunpack.c.l.b16 %v28
  %v68 = vunpack.c.l.b16 %v29
  %v69 = vunpack.c.l.b16 %v30
  %v70 = vunpack.c.l.b16 %v31
  %v71 = vunpack.c.l.b16 %v32
  %v72 = vunpack.c.l.b16 %v33
  %v73 = vunpack.c.l.b16 %v34
  %v74 = vunpack.c.l.b16 %v35
  %v75 = vunpack.c.l.b16 %v36
  %v76 = vpack.c.b16 %v61, %v60
  %v77 = vpack.c.b16 %v63, %v62
  %v78 = vpack.c.b16 %v65, %v64
  %v79 = vpack.c.b16 %v67, %v66
  %v80 = vpack.c.b16 %v69, %v68
  %v81 = vpack.c.b16 %v71, %v70
  %v82 = vpack.c.b16 %v73, %v72
  %v83 = vpack.c.b16 %v75, %v74
  %92 = vmatprep.subr.bf16.mxu0 0
  %93 = vmatpush1.bf16.msra.mxu0 %v76
  %94 = vmatprep.subr.bf16.mxu0 0
  %95 = vmatpush1.bf16.msra.mxu0 %v77
  %96 = vmatprep.subr.bf16.mxu0 0
  %97 = vmatpush1.bf16.msra.mxu0 %v78
  %98 = vmatprep.subr.bf16.mxu0 0
  %99 = vmatpush1.bf16.msra.mxu0 %v79
  %100 = vmatprep.subr.bf16.mxu0 0
  %101 = vmatpush1.bf16.msra.mxu0 %v80
  %102 = vmatprep.subr.bf16.mxu0 0
  %103 = vmatpush1.bf16.msra.mxu0 %v81
  %104 = vmatprep.subr.bf16.mxu0 0
  %105 = vmatpush1.bf16.msra.mxu0 %v82
  %106 = vmatprep.subr.bf16.mxu0 0
  %107 = vmatpush1.bf16.msra.mxu0 %v83
  %108 = vmatprep.subr.bf16.mxu0 0
  %109 = vmatpush1.bf16.msra.mxu0 0
  %110 = vmatprep.subr.bf16.mxu0 0
  %111 = vmatpush1.bf16.msra.mxu0 0
  %112 = vmatprep.subr.bf16.mxu0 0
  %113 = vmatpush1.bf16.msra.mxu0 0
  %114 = vmatprep.subr.bf16.mxu0 0
  %115 = vmatpush1.bf16.msra.mxu0 0
  %116 = vmatprep.subr.bf16.mxu0 0
  %117 = vmatpush1.bf16.msra.mxu0 0
  %118 = vmatprep.subr.bf16.mxu0 0
  %119 = vmatpush1.bf16.msra.mxu0 0
  %120 = vmatprep.subr.bf16.mxu0 0
  %121 = vmatpush1.bf16.msra.mxu0 0
  %122 = vmatprep.subr.bf16.mxu0 0
  %123 = vmatpush1.bf16.msra.mxu0 0
  %124 = vmatprep.mubr.bf16.mxu0 0
  %125 = vmatmul.mubr.bf16.gmra.mrb[0].mxu0 %v20
  %v126 = vpop.f32.mrb[0].mxu0
  %v127 = vadd.f32 %v42, %v126
  %v128 = vpop.f32.mrb[0].mxu0
  %v129 = vpop.f32.mrb[0].mxu0
  %v130 = vadd.f32 %v42, %v129
  %v131 = vpop.f32.mrb[0].mxu0
  %132 = vdwg.mxu0
  %v133 = vld [vmem:[%s3] sm:$0xff]
  %v134 = vld [vmem:[%s3 + $0x8] sm:$0xff]
  %v135 = vadd.f32 %v127, %v133
  %v136 = vadd.f32 %v130, %v134
  %vm137 = vcmask 261120
  %138 = vst.msk [vmem:[%s4] sm:$0xff] %vm137, %v135
  %139 = vst.msk [vmem:[%s4 + $0x8] sm:$0xff] %vm137, %v136
  // Predicated region
  $region18: #{gpt_forward.15} parent=0 // pred_check
    _
  $region19: #{gpt_forward.15} parent=0 // pred_check_branch
    %141 = sbr.rel (0) target = $region21
  $region20: #{gpt_forward.15} parent=0 // pred_region
    _
  $region21: #{gpt_forward.15} parent=0 // pred_fallthru
    _
  // Predicated region
  $region22: #{gpt_forward.15} parent=0 // pred_check
    _
  $region23: #{gpt_forward.15} parent=0 // pred_check_branch
    %143 = sbr.rel (0) target = $region25
  $region24: #{gpt_forward.15} parent=0 // pred_region
    _
  $region25: #{gpt_forward.15} parent=0 // pred_fallthru
    _

// kernel: gpt_forward.21
$region0: #{gpt_forward.21}
  #allocation0 [shape = 'u32[]', space=smem, size = 0x4, offset = 0x4, fixed_abs, tag = 'smem constant byte address 0x4 - core index']
  #allocation1 [shape = 'u32[144,128]{1,0:T(1,128)}', space=vmem, size = 0x12000, scoped, tag = 'internal scratch']
  %s0 = inlined_call_operand.vmem [shape: f32[16,32], index: 0, kind: input, shape index: {}]
  %s1 = inlined_call_operand.vmem [shape: f32[1,32], index: 1, kind: input, shape index: {}]
  %s2 = inlined_call_operand.vmem [shape: f32[1,32], index: 2, kind: input, shape index: {}]
  %s3 = inlined_call_operand.vmem [shape: bf16[32,128], index: 3, kind: input, shape index: {}]
  %s4 = inlined_call_operand.hbm [shape: f32[16,128], index: 4, kind: output, shape index: {}]
  %s5 = sld [smem:[#allocation0]]
  $region26: #{gpt_forward.21} parent=0
    _
  %s7 = ssub.s32 1, %s5
  %s8 = scalar_select 0, %s7, %s5
  $region1: #{gpt_forward.21} parent=0
    #allocation2 [shape = 'u8[8192]{0}', space=vmem, size = 0x2000, scoped, tag = 'output window, operand 0, single buffered']
    #allocation3 [shape = 's32[1]{0}', space=sflag, size = 0x4, scoped, tag = 'scoped memory for gpt_forward.21']
    %9 = vsyncpa [#allocation3], 0
    // Predicated region
    $region2: #{gpt_forward.21} parent=1 // pred_check
      _
    $region3: #{gpt_forward.21} parent=1 // pred_check_branch
      %11 = sbr.rel (0) target = $region5
    $region4: #{gpt_forward.21} parent=1 // pred_region
      _
    $region5: #{gpt_forward.21} parent=1 // pred_fallthru
      _
    // Predicated region
    $region6: #{gpt_forward.21} parent=1 // pred_check
      _
    $region7: #{gpt_forward.21} parent=1 // pred_check_branch
      %13 = sbr.rel (0) target = $region9
    $region8: #{gpt_forward.21} parent=1 // pred_region
      _
    $region9: #{gpt_forward.21} parent=1 // pred_fallthru
      _
    // Predicated region
    $region10: #{gpt_forward.21} parent=1 // pred_check
      _
    $region11: #{gpt_forward.21} parent=1 // pred_check_branch
      %15 = sbr.rel (0) target = $region13
    $region12: #{gpt_forward.21} parent=1 // pred_region
      _
    $region13: #{gpt_forward.21} parent=1 // pred_fallthru
      _
    // Predicated region
    $region14: #{gpt_forward.21} parent=1 // pred_check
      _
    $region15: #{gpt_forward.21} parent=1 // pred_check_branch
      %17 = sbr.rel (0) target = $region17
    $region16: #{gpt_forward.21} parent=1 // pred_region
      _
    $region17: #{gpt_forward.21} parent=1 // pred_fallthru
      _
    %v19 = vld [vmem:[%s0] sm:$0xff]
    %v20 = vld [vmem:[%s0 + $0x8] sm:$0xff]
    %v21 = vld [vmem:[%s1] sm:$0x1]
    %v22 = vld [vmem:[%s2] sm:$0x1]
    %vm23 = vcmask 261120
    %v24 = vsel %vm23, %v19, 0.0
    %25 = vadd.xlane.f32.xlu0 %v24
    %v26 = vpop.xlane.xlu0 %25
    %v27 = vsel %vm23, %v20, 0.0
    %28 = vadd.xlane.f32.xlu0 %v27
    %v29 = vpop.xlane.xlu0 %28
    %v30 = vrcp.pop 32.0
    %v31 = vmul.f32 %v26, %v30
    %v32 = vmul.f32 %v29, %v30
    %v33 = vsub.f32 %v19, %v31
    %v34 = vsub.f32 %v20, %v32
    %v35 = vmul.f32 %v33, %v33
    %v36 = vmul.f32 %v34, %v34
    %v37 = vsel %vm23, %v35, 0.0
    %38 = vadd.xlane.f32.xlu0 %v37
    %v39 = vpop.xlane.xlu0 %38
    %v40 = vsel %vm23, %v36, 0.0
    %41 = vadd.xlane.f32.xlu0 %v40
    %v42 = vpop.xlane.xlu0 %41
    %v43 = vmul.f32 %v39, %v30
    %v44 = vmul.f32 %v42, %v30
    %v45 = vadd.f32 %v43, 1e-05
    %v46 = vadd.f32 %v44, 1e-05
    %v47 = vrsqrt.pop %v45
    %v48 = vrsqrt.pop %v46
    %v49 = vmul.f32 %v33, %v47
    %v50 = vmul.f32 %v34, %v48
    %v52 = vlaneseq
    %v53 = vshrl.u32 %v52, 7
    %v54 = vsub.s32 0, %v53
    %v55 = vrot.slane %v21, %v54
    %v57 = vmul.f32 %v49, %v55
    %v58 = vmul.f32 %v50, %v55
    %v60 = vlaneseq
    %v61 = vshrl.u32 %v60, 7
    %v62 = vsub.s32 0, %v61
    %v63 = vrot.slane %v22, %v62
    %v65 = vadd.f32 %v57, %v63
    %v66 = vadd.f32 %v58, %v63
    %v67 = vpack.c.bf16 %v66, %v65
    %v68 = vld [vmem:[%s3] sm:$0xf]
    %v69 = vld [vmem:[%s3 + $0x4] sm:$0xf]
    %v70 = vld [vmem:[%s3 + $0x8] sm:$0xf]
    %v71 = vld [vmem:[%s3 + $0xc] sm:$0xf]
    %v76 = vunpack.c.l.b16 %v68
    %v77 = vunpack.c.l.b16 %v69
    %v78 = vunpack.c.l.b16 %v70
    %v79 = vunpack.c.l.b16 %v71
    %v80 = vpack.c.b16 %v77, %v76
    %v81 = vpack.c.b16 %v79, %v78
    %v85 = vsel %vm23, %v67, 0
    %87 = vmatprep.subr.bf16.mxu0 0
    %88 = vmatpush1.bf16.msra.mxu0 %v80
    %89 = vmatprep.subr.bf16.mxu0 0
    %90 = vmatpush1.bf16.msra.mxu0 %v81
    %91 = vmatprep.subr.bf16.mxu0 0
    %92 = vmatpush1.bf16.msra.mxu0 0
    %93 = vmatprep.subr.bf16.mxu0 0
    %94 = vmatpush1.bf16.msra.mxu0 0
    %95 = vmatprep.subr.bf16.mxu0 0
    %96 = vmatpush1.bf16.msra.mxu0 0
    %97 = vmatprep.subr.bf16.mxu0 0
    %98 = vmatpush1.bf16.msra.mxu0 0
    %99 = vmatprep.subr.bf16.mxu0 0
    %100 = vmatpush1.bf16.msra.mxu0 0
    %101 = vmatprep.subr.bf16.mxu0 0
    %102 = vmatpush1.bf16.msra.mxu0 0
    %103 = vmatprep.subr.bf16.mxu0 0
    %104 = vmatpush1.bf16.msra.mxu0 0
    %105 = vmatprep.subr.bf16.mxu0 0
    %106 = vmatpush1.bf16.msra.mxu0 0
    %107 = vmatprep.subr.bf16.mxu0 0
    %108 = vmatpush1.bf16.msra.mxu0 0
    %109 = vmatprep.subr.bf16.mxu0 0
    %110 = vmatpush1.bf16.msra.mxu0 0
    %111 = vmatprep.subr.bf16.mxu0 0
    %112 = vmatpush1.bf16.msra.mxu0 0
    %113 = vmatprep.subr.bf16.mxu0 0
    %114 = vmatpush1.bf16.msra.mxu0 0
    %115 = vmatprep.subr.bf16.mxu0 0
    %116 = vmatpush1.bf16.msra.mxu0 0
    %117 = vmatprep.subr.bf16.mxu0 0
    %118 = vmatpush1.bf16.msra.mxu0 0
    %119 = vmatprep.mubr.bf16.mxu0 0
    %120 = vmatmul.mubr.bf16.gmra.mrb[0].mxu0 %v85
    %v121 = vpop.f32.mrb[0].mxu0
    %v122 = vadd.f32 0.0, %v121
    %v123 = vpop.f32.mrb[0].mxu0
    %v124 = vpop.f32.mrb[0].mxu0
    %v125 = vadd.f32 0.0, %v124
    %v126 = vpop.f32.mrb[0].mxu0
    %127 = vdwg.mxu0
    %128 = vst [vmem:[#allocation2] sm:$0xff] %v122
    %129 = vst [vmem:[#allocation2 + $0x8] sm:$0xff] %v125
    // Predicated region
    $region18: #{gpt_forward.21} parent=1 // pred_check
      _
    $region19: #{gpt_forward.21} parent=1 // pred_check_branch
      %131 = sbr.rel (0) target = $region21
    $region20: #{gpt_forward.21} parent=1 // pred_region
      %s133 = ssub.s32 256, 256
      %134 = vsyncadd [#allocation3], %s133
      %s135 = sshll.u32 [#allocation2], 4
      %s136 = int_to_ptr.vmem [resolvable:$true] %s135
      %141 = dma.vmem_to_hbm [thread:$0]  %s136, 256, %s4, [#allocation3], 128, 128, 8
    $region21: #{gpt_forward.21} parent=1 // pred_fallthru
      _
    // Predicated region
    $region22: #{gpt_forward.21} parent=1 // pred_check
      _
    $region23: #{gpt_forward.21} parent=1 // pred_check_branch
      %143 = sbr.rel (0) target = $region25
    $region24: #{gpt_forward.21} parent=1 // pred_region
      %144 = dma.done [#allocation3], 256
    $region25: #{gpt_forward.21} parent=1 // pred_fallthru
      _
    %145 = vsyncpa [#allocation3], 1

</llo_original>
